<compile_context>
chip_gen: v5e
topology: v5e:2x2
jax: 0.10.0
libtpu: 0.0.40
codegen_flags: <defaults>
</compile_context>

<pallas_src>
import jax
import jax.numpy as jnp
from jax import lax
from jax.experimental import pallas as pl
from jax.experimental.pallas import tpu as pltpu

MM_DTYPE = jnp.bfloat16          # MXU operand dtype (accumulation stays f32)


# ---------------------------------------------------------------------------
# Pallas kernel: fused bidirectional LSTM + both linear heads.
# ---------------------------------------------------------------------------
def ias_kernel(xp_ref, mask_ref, w_in_ref, b_in_ref, whh_ref,
               w_slot_ref, b_slot_ref, w_int_ref, b_int_ref,
               slots_ref, intent_ref,
               gin_scr, enc_scr):
    T, B, _ = xp_ref.shape
    H2 = whh_ref.shape[0]          # 2H  (concatenated fwd|bwd state width)
    G = whh_ref.shape[1]           # 8H  (4 gates x 2 directions)
    H = H2 // 2

    # ---- (1) Batched input projection: one MXU matmul for all T, both dirs ----
    # xp[t] = [x_t | x_{T-1-t}], w_in rows [0:E] feed fwd gate cols, rows [E:2E]
    # feed bwd gate cols, so gin[t] holds fwd gates(t) and bwd gates(T-1-t).
    xp2d = xp_ref[...].reshape(T * B, xp_ref.shape[2])
    gin2d = (jnp.dot(xp2d, w_in_ref[...], preferred_element_type=jnp.float32)
             + b_in_ref[...])                            # biases folded in here
    gin_scr[...] = gin2d.reshape(T, B, G)

    # ---- (2) Fused bidirectional recurrence; h/c live in loop carry (vregs) ----
    # Gate column order is gate-major, direction-minor: [i_f i_b | f_f f_b | g_f g_b | o_f o_b]
    # so every gate slice is a contiguous (B, 2H) block aligned with h_cat/c_cat.
    def step(t, carry):
        h_cat, c_cat = carry                                              # (B, 2H) f32
        gates = gin_scr[t] + jnp.dot(h_cat.astype(whh_ref.dtype), whh_ref[...],
                                     preferred_element_type=jnp.float32)  # (B, 8H)
        i = jax.nn.sigmoid(gates[:, 0 * H2:1 * H2])
        f = jax.nn.sigmoid(gates[:, 1 * H2:2 * H2])
        g = jnp.tanh(gates[:, 2 * H2:3 * H2])
        o = jax.nn.sigmoid(gates[:, 3 * H2:4 * H2])
        c_new = f * c_cat + i * g
        h_new = o * jnp.tanh(c_new)

        m = mask_ref[t]                      # (B, 2H) {0,1}: fwd half keyed on t, bwd on T-1-t
        h_out = m * h_new                    # padded positions -> 0  (pad_packed_sequence)
        h_cat = h_out + (1.0 - m) * h_cat    # state holds across padded steps
        c_cat = m * c_new + (1.0 - m) * c_cat

        # fwd half belongs to time t, bwd half to time T-1-t (same lane offsets as
        # in the value, so no cross-lane movement on the stores).
        enc_scr[t, :, 0:H] = h_out[:, 0:H]
        enc_scr[T - 1 - t, :, H:] = h_out[:, H:]
        return (h_cat, c_cat)

    h0 = jnp.zeros((B, H2), jnp.float32)
    c0 = jnp.zeros((B, H2), jnp.float32)
    h_fin, _ = lax.fori_loop(0, T, step, (h0, c0), unroll=True)

    # ---- (3) Slot head: one big lane-dense matmul over all T*B rows ----
    enc2d = enc_scr[...].reshape(T * B, H2).astype(w_slot_ref.dtype)
    slot2d = (jnp.dot(enc2d, w_slot_ref[...], preferred_element_type=jnp.float32)
              + b_slot_ref[...])
    slots_ref[...] = slot2d.reshape(T, B, slots_ref.shape[-1])

    # ---- (4) Intent head on last_hidden = [h_fwd(len-1) | h_bwd(0)] ----
    intent_ref[...] = (jnp.dot(h_fin.astype(w_int_ref.dtype), w_int_ref[...],
                               preferred_element_type=jnp.float32)
                       + b_int_ref[...])


# ---------------------------------------------------------------------------
# Parameter construction (deterministic, synthetic, PyTorch-style layout)
# ---------------------------------------------------------------------------
def init_params(key, vocab_len, emb_size, hid_size, out_slot, out_int, pad_index=0):
    ks = jax.random.split(key, 12)
    bound_h = 1.0 / jnp.sqrt(hid_size)
    bound_e = 1.0 / jnp.sqrt(2 * hid_size)

    def u(k, shape, b):
        return jax.random.uniform(k, shape, jnp.float32, -b, b)

    emb = jax.random.normal(ks[0], (vocab_len, emb_size), jnp.float32)
    emb = emb.at[pad_index].set(0.0)            # padding_idx=0 -> zero row

    return dict(
        embedding=emb,
        # LSTM weights stored pre-transposed for x @ W layout, gate order i,f,g,o
        wih_f=u(ks[1], (emb_size, 4 * hid_size), bound_h),
        whh_f=u(ks[2], (hid_size, 4 * hid_size), bound_h),
        b_f=u(ks[3], (1, 4 * hid_size), bound_h),          # b_ih + b_hh combined
        wih_b=u(ks[4], (emb_size, 4 * hid_size), bound_h),
        whh_b=u(ks[5], (hid_size, 4 * hid_size), bound_h),
        b_b=u(ks[6], (1, 4 * hid_size), bound_h),
        w_slot=u(ks[7], (2 * hid_size, out_slot), bound_e),
        b_slot=u(ks[8], (1, out_slot), bound_e),
        w_int=u(ks[9], (2 * hid_size, out_int), bound_e),
        b_int=u(ks[10], (1, out_int), bound_e),
    )


# ---------------------------------------------------------------------------
# Weight packing (pure layout glue, constant-folded under jit)
# ---------------------------------------------------------------------------
def _pack_lstm(params, hid_size):
    """Build (2E,8H) input projection, (1,8H) bias, (2H,8H) block-diag Whh with
    gate-major / direction-minor column order [i_f i_b f_f f_b g_f g_b o_f o_b]."""
    H = hid_size
    G = 8 * H

    def scatter_rows(wf, wb):
        wf3 = wf.reshape(-1, 4, H)
        wb3 = wb.reshape(-1, 4, H)
        top = jnp.stack([wf3, jnp.zeros_like(wf3)], axis=2).reshape(-1, G)
        bot = jnp.stack([jnp.zeros_like(wb3), wb3], axis=2).reshape(-1, G)
        return jnp.concatenate([top, bot], axis=0)

    w_in = scatter_rows(params["wih_f"], params["wih_b"])     # (2E, 8H)
    whh = scatter_rows(params["whh_f"], params["whh_b"])      # (2H, 8H) block-diagonal
    b_in = jnp.stack([params["b_f"].reshape(1, 4, H),
                      params["b_b"].reshape(1, 4, H)], axis=2).reshape(1, G)
    return w_in, b_in, whh


def _pad_lanes(w, mult=128):
    pad = (-w.shape[-1]) % mult
    if pad == 0:
        return w
    return jnp.pad(w, [(0, 0)] * (w.ndim - 1) + [(0, pad)])


# ---------------------------------------------------------------------------
# Wrapper == ModelIAS.forward (bidirectional=True, n_layer=1)
# ---------------------------------------------------------------------------
def model_ias_forward(utterance, seq_lengths, params, hid_size):
    # nn.Embedding lookup (gather) is glue, done in plain JAX.
    utt_emb = params["embedding"][utterance]            # (B, T, E)
    # TODO(synk): nn.Dropout is identity at inference; training-mode dropout not implemented.
    B, T, E = utt_emb.shape
    H = hid_size
    out_slot = params["w_slot"].shape[1]
    out_int = params["w_int"].shape[1]

    # Time-major, and pair each step with its time-mirror so the fused loop's
    # backward direction reads x_{T-1-t} from the same row: xp[t] = [x_t | x_{T-1-t}].
    x_tbe = jnp.transpose(utt_emb, (1, 0, 2)).astype(jnp.float32)     # (T, B, E)
    x_pair = jnp.concatenate([x_tbe, jnp.flip(x_tbe, axis=0)], axis=-1).astype(MM_DTYPE)

    # Precomputed {0,1} validity mask (hoists all per-step compares/broadcasts):
    # fwd half valid iff t < len[b]; bwd half valid iff (T-1-t) < len[b].
    lens = seq_lengths.astype(jnp.int32)
    t_idx = jnp.arange(T, dtype=jnp.int32)[:, None]                    # (T, 1)
    fwd_valid = (t_idx < lens[None, :]).astype(jnp.float32)            # (T, B)
    bwd_valid = ((T - 1 - t_idx) < lens[None, :]).astype(jnp.float32)  # (T, B)
    mask = jnp.concatenate(
        [jnp.broadcast_to(fwd_valid[:, :, None], (T, B, H)),
         jnp.broadcast_to(bwd_valid[:, :, None], (T, B, H))], axis=-1)  # (T, B, 2H)

    w_in, b_in, whh_blk = _pack_lstm(params, H)
    w_in = w_in.astype(MM_DTYPE)
    whh_blk = whh_blk.astype(MM_DTYPE)

    # Lane-dense heads: pad output columns to a multiple of 128, slice back below.
    w_slot_p = _pad_lanes(params["w_slot"]).astype(MM_DTYPE)
    b_slot_p = _pad_lanes(params["b_slot"])
    w_int_p = _pad_lanes(params["w_int"]).astype(MM_DTYPE)
    b_int_p = _pad_lanes(params["b_int"])
    OSp = w_slot_p.shape[1]
    OIp = w_int_p.shape[1]

    vmem = pl.BlockSpec(memory_space=pltpu.MemorySpace.VMEM)
    # NOTE: at production scales (large B/T/H) add a batch grid with
    # dimension_semantics=("parallel",) and set vmem_limit_bytes (v7x: 64 MiB VMEM,
    # 2 TensorCores).  At this toy size a single invocation is optimal.
    slots_p, intent_p = pl.pallas_call(
        ias_kernel,
        out_shape=(
            jax.ShapeDtypeStruct((T, B, OSp), jnp.float32),
            jax.ShapeDtypeStruct((B, OIp), jnp.float32),
        ),
        in_specs=[vmem] * 9,
        out_specs=(vmem, vmem),
        scratch_shapes=[
            pltpu.VMEM((T, B, 8 * H), jnp.float32),   # precomputed gate inputs
            pltpu.VMEM((T, B, 2 * H), jnp.float32),   # encoder outputs [fwd | bwd]
        ],
    )(x_pair, mask, w_in, b_in, whh_blk, w_slot_p, b_slot_p, w_int_p, b_int_p)

    # slice padded lanes + permute(0, 2, 1): (T, B, out_slot) -> (B, out_slot, T)
    slots = jnp.transpose(slots_p[:, :, :out_slot], (1, 2, 0))
    intent = intent_p[:, :out_int]
    return slots, intent


if __name__ == "__main__":
    # Small shapes consistent with the module.
    B, T = 2, 8
    emb_size, hid_size = 32, 32
    vocab_len, out_slot, out_int = 50, 12, 5
    pad_index = 0

    key = jax.random.PRNGKey(0)
    kp, kt = jax.random.split(key)
    params = init_params(kp, vocab_len, emb_size, hid_size, out_slot, out_int, pad_index)

    # Sorted (descending) lengths, pad with index 0 past each length.
    seq_lengths = jnp.array([8, 5], dtype=jnp.int32)
    tokens = jax.random.randint(kt, (B, T), 1, vocab_len, dtype=jnp.int32)
    time_idx = jnp.arange(T)[None, :]
    utterance = jnp.where(time_idx < seq_lengths[:, None], tokens, pad_index)

    slots, intent = jax.jit(
        lambda u, l: model_ias_forward(u, l, params, hid_size)
    )(utterance, seq_lengths)
    jax.block_until_ready((slots, intent))

    assert slots.shape == (B, out_slot, T), slots.shape
    assert intent.shape == (B, out_int), intent.shape
    print("KERNEL_OK")
</pallas_src>

<mosaic_0001>
module attributes {stable_mosaic.version = 11 : i64} {
  func.func @ias_kernel(%arg0: memref<8x2x64xbf16, #tpu.memory_space<vmem>>, %arg1: memref<8x2x64xf32, #tpu.memory_space<vmem>>, %arg2: memref<64x256xbf16, #tpu.memory_space<vmem>>, %arg3: memref<1x256xf32, #tpu.memory_space<vmem>>, %arg4: memref<64x256xbf16, #tpu.memory_space<vmem>>, %arg5: memref<64x128xbf16, #tpu.memory_space<vmem>>, %arg6: memref<1x128xf32, #tpu.memory_space<vmem>>, %arg7: memref<64x128xbf16, #tpu.memory_space<vmem>>, %arg8: memref<1x128xf32, #tpu.memory_space<vmem>>, %arg9: memref<8x2x128xf32, #tpu.memory_space<vmem>>, %arg10: memref<2x128xf32, #tpu.memory_space<vmem>>, %arg11: memref<8x2x256xf32, #tpu.memory_space<vmem>>, %arg12: memref<8x2x64xf32, #tpu.memory_space<vmem>>) attributes {dimension_semantics = [], scalar_prefetch = 0 : i64, scratch_operands = 2 : i64, tpu.core_type = #tpu.core_type<tc>} {
    %c0 = arith.constant 0 : index
    %c0_0 = arith.constant 0 : index
    %c0_1 = arith.constant 0 : index
    %0 = vector.load %arg0[%c0, %c0_0, %c0_1] : memref<8x2x64xbf16, #tpu.memory_space<vmem>>, vector<8x2x64xbf16>
    %1 = vector.shape_cast %0 : vector<8x2x64xbf16> to vector<16x64xbf16>
    %c0_2 = arith.constant 0 : index
    %c0_3 = arith.constant 0 : index
    %2 = vector.load %arg2[%c0_2, %c0_3] : memref<64x256xbf16, #tpu.memory_space<vmem>>, vector<64x256xbf16>
    %cst = arith.constant dense<0.000000e+00> : vector<16x256xf32>
    %3 = tpu.matmul %1, %2, %cst {dimension_numbers = #tpu.dot_dimension_numbers<[1], [0], [0], [1], [0, 0, 1, 1], [], []>} : vector<16x64xbf16>, vector<64x256xbf16>, vector<16x256xf32> -> vector<16x256xf32>
    %c0_4 = arith.constant 0 : index
    %c0_5 = arith.constant 0 : index
    %4 = vector.load %arg3[%c0_4, %c0_5] : memref<1x256xf32, #tpu.memory_space<vmem>>, vector<1x256xf32>
    %5 = vector.broadcast %4 : vector<1x256xf32> to vector<16x256xf32>
    %6 = arith.addf %3, %5 : vector<16x256xf32>
    %7 = vector.shape_cast %6 : vector<16x256xf32> to vector<8x2x256xf32>
    %c0_6 = arith.constant 0 : index
    %c0_7 = arith.constant 0 : index
    %c0_8 = arith.constant 0 : index
    %8 = vector.load %arg11[%c0_6, %c0_7, %c0_8] : memref<8x2x256xf32, #tpu.memory_space<vmem>>, vector<8x2x256xf32>
    tpu.vector_store %arg11[%c0_6, %c0_7, %c0_8], %7 {strides = array<i32>} : memref<8x2x256xf32, #tpu.memory_space<vmem>>, vector<8x2x256xf32>,
    %cst_9 = arith.constant 0.000000e+00 : f32
    %9 = vector.broadcast %cst_9 : f32 to vector<2x64xf32>
    %cst_10 = arith.constant 0.000000e+00 : f32
    %10 = vector.broadcast %cst_10 : f32 to vector<2x64xf32>
    %c0_i32 = arith.constant 0 : i32
    %11 = arith.index_cast %c0_i32 : i32 to index
    %c0_11 = arith.constant 0 : index
    %c0_12 = arith.constant 0 : index
    %12 = vector.load %arg11[%11, %c0_11, %c0_12] : memref<8x2x256xf32, #tpu.memory_space<vmem>>, vector<1x2x256xf32>
    %13 = vector.shape_cast %12 : vector<1x2x256xf32> to vector<2x256xf32>
    %14 = arith.truncf %9 : vector<2x64xf32> to vector<2x64xbf16>
    %c0_13 = arith.constant 0 : index
    %c0_14 = arith.constant 0 : index
    %15 = vector.load %arg4[%c0_13, %c0_14] : memref<64x256xbf16, #tpu.memory_space<vmem>>, vector<64x256xbf16>
    %cst_15 = arith.constant dense<0.000000e+00> : vector<2x256xf32>
    %16 = tpu.matmul %14, %15, %cst_15 {dimension_numbers = #tpu.dot_dimension_numbers<[1], [0], [0], [1], [0, 0, 1, 1], [], []>} : vector<2x64xbf16>, vector<64x256xbf16>, vector<2x256xf32> -> vector<2x256xf32>
    %17 = arith.addf %13, %16 : vector<2x256xf32>
    %18 = vector.extract_strided_slice %17 {offsets = [0, 0], sizes = [2, 64], strides = [1, 1]} : vector<2x256xf32> to vector<2x64xf32>
    %19 = arith.negf %18 : vector<2x64xf32>
    %20 = math.exp %19 : vector<2x64xf32>
    %cst_16 = arith.constant 1.000000e+00 : f32
    %21 = vector.broadcast %cst_16 : f32 to vector<2x64xf32>
    %22 = arith.addf %21, %20 : vector<2x64xf32>
    %23 = arith.divf %21, %22 : vector<2x64xf32>
    %24 = vector.extract_strided_slice %17 {offsets = [0, 64], sizes = [2, 64], strides = [1, 1]} : vector<2x256xf32> to vector<2x64xf32>
    %25 = arith.negf %24 : vector<2x64xf32>
    %26 = math.exp %25 : vector<2x64xf32>
    %cst_17 = arith.constant 1.000000e+00 : f32
    %27 = vector.broadcast %cst_17 : f32 to vector<2x64xf32>
    %28 = arith.addf %27, %26 : vector<2x64xf32>
    %29 = arith.divf %27, %28 : vector<2x64xf32>
    %30 = vector.extract_strided_slice %17 {offsets = [0, 128], sizes = [2, 64], strides = [1, 1]} : vector<2x256xf32> to vector<2x64xf32>
    %31 = math.tanh %30 : vector<2x64xf32>
    %32 = vector.extract_strided_slice %17 {offsets = [0, 192], sizes = [2, 64], strides = [1, 1]} : vector<2x256xf32> to vector<2x64xf32>
    %33 = arith.negf %32 : vector<2x64xf32>
    %34 = math.exp %33 : vector<2x64xf32>
    %cst_18 = arith.constant 1.000000e+00 : f32
    %35 = vector.broadcast %cst_18 : f32 to vector<2x64xf32>
    %36 = arith.addf %35, %34 : vector<2x64xf32>
    %37 = arith.divf %35, %36 : vector<2x64xf32>
    %38 = arith.mulf %29, %10 : vector<2x64xf32>
    %39 = arith.mulf %23, %31 : vector<2x64xf32>
    %40 = arith.addf %38, %39 : vector<2x64xf32>
    %41 = math.tanh %40 : vector<2x64xf32>
    %42 = arith.mulf %37, %41 : vector<2x64xf32>
    %43 = arith.index_cast %c0_i32 : i32 to index
    %c0_19 = arith.constant 0 : index
    %c0_20 = arith.constant 0 : index
    %44 = vector.load %arg1[%43, %c0_19, %c0_20] : memref<8x2x64xf32, #tpu.memory_space<vmem>>, vector<1x2x64xf32>
    %45 = vector.shape_cast %44 : vector<1x2x64xf32> to vector<2x64xf32>
    %46 = arith.mulf %45, %42 : vector<2x64xf32>
    %cst_21 = arith.constant 1.000000e+00 : f32
    %47 = vector.broadcast %cst_21 : f32 to vector<2x64xf32>
    %48 = arith.subf %47, %45 : vector<2x64xf32>
    %49 = arith.mulf %48, %9 : vector<2x64xf32>
    %50 = arith.addf %46, %49 : vector<2x64xf32>
    %51 = arith.mulf %45, %40 : vector<2x64xf32>
    %cst_22 = arith.constant 1.000000e+00 : f32
    %52 = vector.broadcast %cst_22 : f32 to vector<2x64xf32>
    %53 = arith.subf %52, %45 : vector<2x64xf32>
    %54 = arith.mulf %53, %10 : vector<2x64xf32>
    %55 = arith.addf %51, %54 : vector<2x64xf32>
    %56 = vector.extract_strided_slice %46 {offsets = [0, 0], sizes = [2, 32], strides = [1, 1]} : vector<2x64xf32> to vector<2x32xf32>
    %57 = arith.index_cast %c0_i32 : i32 to index
    %c0_23 = arith.constant 0 : index
    %c0_24 = arith.constant 0 : index
    %58 = vector.load %arg12[%57, %c0_23, %c0_24] : memref<8x2x64xf32, #tpu.memory_space<vmem>>, vector<1x2x32xf32>
    %59 = vector.shape_cast %58 : vector<1x2x32xf32> to vector<2x32xf32>
    %60 = vector.shape_cast %56 : vector<2x32xf32> to vector<1x2x32xf32>
    tpu.vector_store %arg12[%57, %c0_23, %c0_24], %60 {strides = array<i32>} : memref<8x2x64xf32, #tpu.memory_space<vmem>>, vector<1x2x32xf32>,
    %61 = vector.extract_strided_slice %46 {offsets = [0, 32], sizes = [2, 32], strides = [1, 1]} : vector<2x64xf32> to vector<2x32xf32>
    %c7_i32 = arith.constant 7 : i32
    %62 = arith.subi %c7_i32, %c0_i32 : i32
    %63 = arith.index_cast %62 : i32 to index
    %c0_25 = arith.constant 0 : index
    %c32 = arith.constant 32 : index
    %64 = vector.load %arg12[%63, %c0_25, %c32] : memref<8x2x64xf32, #tpu.memory_space<vmem>>, vector<1x2x32xf32>
    %65 = vector.shape_cast %64 : vector<1x2x32xf32> to vector<2x32xf32>
    %66 = vector.shape_cast %61 : vector<2x32xf32> to vector<1x2x32xf32>
    tpu.vector_store %arg12[%63, %c0_25, %c32], %66 {strides = array<i32>} : memref<8x2x64xf32, #tpu.memory_space<vmem>>, vector<1x2x32xf32>,
    %c1_i32 = arith.constant 1 : i32
    %67 = arith.index_cast %c1_i32 : i32 to index
    %c0_26 = arith.constant 0 : index
    %c0_27 = arith.constant 0 : index
    %68 = vector.load %arg11[%67, %c0_26, %c0_27] : memref<8x2x256xf32, #tpu.memory_space<vmem>>, vector<1x2x256xf32>
    %69 = vector.shape_cast %68 : vector<1x2x256xf32> to vector<2x256xf32>
    %70 = arith.truncf %50 : vector<2x64xf32> to vector<2x64xbf16>
    %c0_28 = arith.constant 0 : index
    %c0_29 = arith.constant 0 : index
    %71 = vector.load %arg4[%c0_28, %c0_29] : memref<64x256xbf16, #tpu.memory_space<vmem>>, vector<64x256xbf16>
    %cst_30 = arith.constant dense<0.000000e+00> : vector<2x256xf32>
    %72 = tpu.matmul %70, %71, %cst_30 {dimension_numbers = #tpu.dot_dimension_numbers<[1], [0], [0], [1], [0, 0, 1, 1], [], []>} : vector<2x64xbf16>, vector<64x256xbf16>, vector<2x256xf32> -> vector<2x256xf32>
    %73 = arith.addf %69, %72 : vector<2x256xf32>
    %74 = vector.extract_strided_slice %73 {offsets = [0, 0], sizes = [2, 64], strides = [1, 1]} : vector<2x256xf32> to vector<2x64xf32>
    %75 = arith.negf %74 : vector<2x64xf32>
    %76 = math.exp %75 : vector<2x64xf32>
    %cst_31 = arith.constant 1.000000e+00 : f32
    %77 = vector.broadcast %cst_31 : f32 to vector<2x64xf32>
    %78 = arith.addf %77, %76 : vector<2x64xf32>
    %79 = arith.divf %77, %78 : vector<2x64xf32>
    %80 = vector.extract_strided_slice %73 {offsets = [0, 64], sizes = [2, 64], strides = [1, 1]} : vector<2x256xf32> to vector<2x64xf32>
    %81 = arith.negf %80 : vector<2x64xf32>
    %82 = math.exp %81 : vector<2x64xf32>
    %cst_32 = arith.constant 1.000000e+00 : f32
    %83 = vector.broadcast %cst_32 : f32 to vector<2x64xf32>
    %84 = arith.addf %83, %82 : vector<2x64xf32>
    %85 = arith.divf %83, %84 : vector<2x64xf32>
    %86 = vector.extract_strided_slice %73 {offsets = [0, 128], sizes = [2, 64], strides = [1, 1]} : vector<2x256xf32> to vector<2x64xf32>
    %87 = math.tanh %86 : vector<2x64xf32>
    %88 = vector.extract_strided_slice %73 {offsets = [0, 192], sizes = [2, 64], strides = [1, 1]} : vector<2x256xf32> to vector<2x64xf32>
    %89 = arith.negf %88 : vector<2x64xf32>
    %90 = math.exp %89 : vector<2x64xf32>
    %cst_33 = arith.constant 1.000000e+00 : f32
    %91 = vector.broadcast %cst_33 : f32 to vector<2x64xf32>
    %92 = arith.addf %91, %90 : vector<2x64xf32>
    %93 = arith.divf %91, %92 : vector<2x64xf32>
    %94 = arith.mulf %85, %55 : vector<2x64xf32>
    %95 = arith.mulf %79, %87 : vector<2x64xf32>
    %96 = arith.addf %94, %95 : vector<2x64xf32>
    %97 = math.tanh %96 : vector<2x64xf32>
    %98 = arith.mulf %93, %97 : vector<2x64xf32>
    %99 = arith.index_cast %c1_i32 : i32 to index
    %c0_34 = arith.constant 0 : index
    %c0_35 = arith.constant 0 : index
    %100 = vector.load %arg1[%99, %c0_34, %c0_35] : memref<8x2x64xf32, #tpu.memory_space<vmem>>, vector<1x2x64xf32>
    %101 = vector.shape_cast %100 : vector<1x2x64xf32> to vector<2x64xf32>
    %102 = arith.mulf %101, %98 : vector<2x64xf32>
    %cst_36 = arith.constant 1.000000e+00 : f32
    %103 = vector.broadcast %cst_36 : f32 to vector<2x64xf32>
    %104 = arith.subf %103, %101 : vector<2x64xf32>
    %105 = arith.mulf %104, %50 : vector<2x64xf32>
    %106 = arith.addf %102, %105 : vector<2x64xf32>
    %107 = arith.mulf %101, %96 : vector<2x64xf32>
    %cst_37 = arith.constant 1.000000e+00 : f32
    %108 = vector.broadcast %cst_37 : f32 to vector<2x64xf32>
    %109 = arith.subf %108, %101 : vector<2x64xf32>
    %110 = arith.mulf %109, %55 : vector<2x64xf32>
    %111 = arith.addf %107, %110 : vector<2x64xf32>
    %112 = vector.extract_strided_slice %102 {offsets = [0, 0], sizes = [2, 32], strides = [1, 1]} : vector<2x64xf32> to vector<2x32xf32>
    %113 = arith.index_cast %c1_i32 : i32 to index
    %c0_38 = arith.constant 0 : index
    %c0_39 = arith.constant 0 : index
    %114 = vector.load %arg12[%113, %c0_38, %c0_39] : memref<8x2x64xf32, #tpu.memory_space<vmem>>, vector<1x2x32xf32>
    %115 = vector.shape_cast %114 : vector<1x2x32xf32> to vector<2x32xf32>
    %116 = vector.shape_cast %112 : vector<2x32xf32> to vector<1x2x32xf32>
    tpu.vector_store %arg12[%113, %c0_38, %c0_39], %116 {strides = array<i32>} : memref<8x2x64xf32, #tpu.memory_space<vmem>>, vector<1x2x32xf32>,
    %117 = vector.extract_strided_slice %102 {offsets = [0, 32], sizes = [2, 32], strides = [1, 1]} : vector<2x64xf32> to vector<2x32xf32>
    %c7_i32_40 = arith.constant 7 : i32
    %118 = arith.subi %c7_i32_40, %c1_i32 : i32
    %119 = arith.index_cast %118 : i32 to index
    %c0_41 = arith.constant 0 : index
    %c32_42 = arith.constant 32 : index
    %120 = vector.load %arg12[%119, %c0_41, %c32_42] : memref<8x2x64xf32, #tpu.memory_space<vmem>>, vector<1x2x32xf32>
    %121 = vector.shape_cast %120 : vector<1x2x32xf32> to vector<2x32xf32>
    %122 = vector.shape_cast %117 : vector<2x32xf32> to vector<1x2x32xf32>
    tpu.vector_store %arg12[%119, %c0_41, %c32_42], %122 {strides = array<i32>} : memref<8x2x64xf32, #tpu.memory_space<vmem>>, vector<1x2x32xf32>,
    %c2_i32 = arith.constant 2 : i32
    %123 = arith.index_cast %c2_i32 : i32 to index
    %c0_43 = arith.constant 0 : index
    %c0_44 = arith.constant 0 : index
    %124 = vector.load %arg11[%123, %c0_43, %c0_44] : memref<8x2x256xf32, #tpu.memory_space<vmem>>, vector<1x2x256xf32>
    %125 = vector.shape_cast %124 : vector<1x2x256xf32> to vector<2x256xf32>
    %126 = arith.truncf %106 : vector<2x64xf32> to vector<2x64xbf16>
    %c0_45 = arith.constant 0 : index
    %c0_46 = arith.constant 0 : index
    %127 = vector.load %arg4[%c0_45, %c0_46] : memref<64x256xbf16, #tpu.memory_space<vmem>>, vector<64x256xbf16>
    %cst_47 = arith.constant dense<0.000000e+00> : vector<2x256xf32>
    %128 = tpu.matmul %126, %127, %cst_47 {dimension_numbers = #tpu.dot_dimension_numbers<[1], [0], [0], [1], [0, 0, 1, 1], [], []>} : vector<2x64xbf16>, vector<64x256xbf16>, vector<2x256xf32> -> vector<2x256xf32>
    %129 = arith.addf %125, %128 : vector<2x256xf32>
    %130 = vector.extract_strided_slice %129 {offsets = [0, 0], sizes = [2, 64], strides = [1, 1]} : vector<2x256xf32> to vector<2x64xf32>
    %131 = arith.negf %130 : vector<2x64xf32>
    %132 = math.exp %131 : vector<2x64xf32>
    %cst_48 = arith.constant 1.000000e+00 : f32
    %133 = vector.broadcast %cst_48 : f32 to vector<2x64xf32>
    %134 = arith.addf %133, %132 : vector<2x64xf32>
    %135 = arith.divf %133, %134 : vector<2x64xf32>
    %136 = vector.extract_strided_slice %129 {offsets = [0, 64], sizes = [2, 64], strides = [1, 1]} : vector<2x256xf32> to vector<2x64xf32>
    %137 = arith.negf %136 : vector<2x64xf32>
    %138 = math.exp %137 : vector<2x64xf32>
    %cst_49 = arith.constant 1.000000e+00 : f32
    %139 = vector.broadcast %cst_49 : f32 to vector<2x64xf32>
    %140 = arith.addf %139, %138 : vector<2x64xf32>
    %141 = arith.divf %139, %140 : vector<2x64xf32>
    %142 = vector.extract_strided_slice %129 {offsets = [0, 128], sizes = [2, 64], strides = [1, 1]} : vector<2x256xf32> to vector<2x64xf32>
    %143 = math.tanh %142 : vector<2x64xf32>
    %144 = vector.extract_strided_slice %129 {offsets = [0, 192], sizes = [2, 64], strides = [1, 1]} : vector<2x256xf32> to vector<2x64xf32>
    %145 = arith.negf %144 : vector<2x64xf32>
    %146 = math.exp %145 : vector<2x64xf32>
    %cst_50 = arith.constant 1.000000e+00 : f32
    %147 = vector.broadcast %cst_50 : f32 to vector<2x64xf32>
    %148 = arith.addf %147, %146 : vector<2x64xf32>
    %149 = arith.divf %147, %148 : vector<2x64xf32>
    %150 = arith.mulf %141, %111 : vector<2x64xf32>
    %151 = arith.mulf %135, %143 : vector<2x64xf32>
    %152 = arith.addf %150, %151 : vector<2x64xf32>
    %153 = math.tanh %152 : vector<2x64xf32>
    %154 = arith.mulf %149, %153 : vector<2x64xf32>
    %155 = arith.index_cast %c2_i32 : i32 to index
    %c0_51 = arith.constant 0 : index
    %c0_52 = arith.constant 0 : index
    %156 = vector.load %arg1[%155, %c0_51, %c0_52] : memref<8x2x64xf32, #tpu.memory_space<vmem>>, vector<1x2x64xf32>
    %157 = vector.shape_cast %156 : vector<1x2x64xf32> to vector<2x64xf32>
    %158 = arith.mulf %157, %154 : vector<2x64xf32>
    %cst_53 = arith.constant 1.000000e+00 : f32
    %159 = vector.broadcast %cst_53 : f32 to vector<2x64xf32>
    %160 = arith.subf %159, %157 : vector<2x64xf32>
    %161 = arith.mulf %160, %106 : vector<2x64xf32>
    %162 = arith.addf %158, %161 : vector<2x64xf32>
    %163 = arith.mulf %157, %152 : vector<2x64xf32>
    %cst_54 = arith.constant 1.000000e+00 : f32
    %164 = vector.broadcast %cst_54 : f32 to vector<2x64xf32>
    %165 = arith.subf %164, %157 : vector<2x64xf32>
    %166 = arith.mulf %165, %111 : vector<2x64xf32>
    %167 = arith.addf %163, %166 : vector<2x64xf32>
    %168 = vector.extract_strided_slice %158 {offsets = [0, 0], sizes = [2, 32], strides = [1, 1]} : vector<2x64xf32> to vector<2x32xf32>
    %169 = arith.index_cast %c2_i32 : i32 to index
    %c0_55 = arith.constant 0 : index
    %c0_56 = arith.constant 0 : index
    %170 = vector.load %arg12[%169, %c0_55, %c0_56] : memref<8x2x64xf32, #tpu.memory_space<vmem>>, vector<1x2x32xf32>
    %171 = vector.shape_cast %170 : vector<1x2x32xf32> to vector<2x32xf32>
    %172 = vector.shape_cast %168 : vector<2x32xf32> to vector<1x2x32xf32>
    tpu.vector_store %arg12[%169, %c0_55, %c0_56], %172 {strides = array<i32>} : memref<8x2x64xf32, #tpu.memory_space<vmem>>, vector<1x2x32xf32>,
    %173 = vector.extract_strided_slice %158 {offsets = [0, 32], sizes = [2, 32], strides = [1, 1]} : vector<2x64xf32> to vector<2x32xf32>
    %c7_i32_57 = arith.constant 7 : i32
    %174 = arith.subi %c7_i32_57, %c2_i32 : i32
    %175 = arith.index_cast %174 : i32 to index
    %c0_58 = arith.constant 0 : index
    %c32_59 = arith.constant 32 : index
    %176 = vector.load %arg12[%175, %c0_58, %c32_59] : memref<8x2x64xf32, #tpu.memory_space<vmem>>, vector<1x2x32xf32>
    %177 = vector.shape_cast %176 : vector<1x2x32xf32> to vector<2x32xf32>
    %178 = vector.shape_cast %173 : vector<2x32xf32> to vector<1x2x32xf32>
    tpu.vector_store %arg12[%175, %c0_58, %c32_59], %178 {strides = array<i32>} : memref<8x2x64xf32, #tpu.memory_space<vmem>>, vector<1x2x32xf32>,
    %c3_i32 = arith.constant 3 : i32
    %179 = arith.index_cast %c3_i32 : i32 to index
    %c0_60 = arith.constant 0 : index
    %c0_61 = arith.constant 0 : index
    %180 = vector.load %arg11[%179, %c0_60, %c0_61] : memref<8x2x256xf32, #tpu.memory_space<vmem>>, vector<1x2x256xf32>
    %181 = vector.shape_cast %180 : vector<1x2x256xf32> to vector<2x256xf32>
    %182 = arith.truncf %162 : vector<2x64xf32> to vector<2x64xbf16>
    %c0_62 = arith.constant 0 : index
    %c0_63 = arith.constant 0 : index
    %183 = vector.load %arg4[%c0_62, %c0_63] : memref<64x256xbf16, #tpu.memory_space<vmem>>, vector<64x256xbf16>
    %cst_64 = arith.constant dense<0.000000e+00> : vector<2x256xf32>
    %184 = tpu.matmul %182, %183, %cst_64 {dimension_numbers = #tpu.dot_dimension_numbers<[1], [0], [0], [1], [0, 0, 1, 1], [], []>} : vector<2x64xbf16>, vector<64x256xbf16>, vector<2x256xf32> -> vector<2x256xf32>
    %185 = arith.addf %181, %184 : vector<2x256xf32>
    %186 = vector.extract_strided_slice %185 {offsets = [0, 0], sizes = [2, 64], strides = [1, 1]} : vector<2x256xf32> to vector<2x64xf32>
    %187 = arith.negf %186 : vector<2x64xf32>
    %188 = math.exp %187 : vector<2x64xf32>
    %cst_65 = arith.constant 1.000000e+00 : f32
    %189 = vector.broadcast %cst_65 : f32 to vector<2x64xf32>
    %190 = arith.addf %189, %188 : vector<2x64xf32>
    %191 = arith.divf %189, %190 : vector<2x64xf32>
    %192 = vector.extract_strided_slice %185 {offsets = [0, 64], sizes = [2, 64], strides = [1, 1]} : vector<2x256xf32> to vector<2x64xf32>
    %193 = arith.negf %192 : vector<2x64xf32>
    %194 = math.exp %193 : vector<2x64xf32>
    %cst_66 = arith.constant 1.000000e+00 : f32
    %195 = vector.broadcast %cst_66 : f32 to vector<2x64xf32>
    %196 = arith.addf %195, %194 : vector<2x64xf32>
    %197 = arith.divf %195, %196 : vector<2x64xf32>
    %198 = vector.extract_strided_slice %185 {offsets = [0, 128], sizes = [2, 64], strides = [1, 1]} : vector<2x256xf32> to vector<2x64xf32>
    %199 = math.tanh %198 : vector<2x64xf32>
    %200 = vector.extract_strided_slice %185 {offsets = [0, 192], sizes = [2, 64], strides = [1, 1]} : vector<2x256xf32> to vector<2x64xf32>
    %201 = arith.negf %200 : vector<2x64xf32>
    %202 = math.exp %201 : vector<2x64xf32>
    %cst_67 = arith.constant 1.000000e+00 : f32
    %203 = vector.broadcast %cst_67 : f32 to vector<2x64xf32>
    %204 = arith.addf %203, %202 : vector<2x64xf32>
    %205 = arith.divf %203, %204 : vector<2x64xf32>
    %206 = arith.mulf %197, %167 : vector<2x64xf32>
    %207 = arith.mulf %191, %199 : vector<2x64xf32>
    %208 = arith.addf %206, %207 : vector<2x64xf32>
    %209 = math.tanh %208 : vector<2x64xf32>
    %210 = arith.mulf %205, %209 : vector<2x64xf32>
    %211 = arith.index_cast %c3_i32 : i32 to index
    %c0_68 = arith.constant 0 : index
    %c0_69 = arith.constant 0 : index
    %212 = vector.load %arg1[%211, %c0_68, %c0_69] : memref<8x2x64xf32, #tpu.memory_space<vmem>>, vector<1x2x64xf32>
    %213 = vector.shape_cast %212 : vector<1x2x64xf32> to vector<2x64xf32>
    %214 = arith.mulf %213, %210 : vector<2x64xf32>
    %cst_70 = arith.constant 1.000000e+00 : f32
    %215 = vector.broadcast %cst_70 : f32 to vector<2x64xf32>
    %216 = arith.subf %215, %213 : vector<2x64xf32>
    %217 = arith.mulf %216, %162 : vector<2x64xf32>
    %218 = arith.addf %214, %217 : vector<2x64xf32>
    %219 = arith.mulf %213, %208 : vector<2x64xf32>
    %cst_71 = arith.constant 1.000000e+00 : f32
    %220 = vector.broadcast %cst_71 : f32 to vector<2x64xf32>
    %221 = arith.subf %220, %213 : vector<2x64xf32>
    %222 = arith.mulf %221, %167 : vector<2x64xf32>
    %223 = arith.addf %219, %222 : vector<2x64xf32>
    %224 = vector.extract_strided_slice %214 {offsets = [0, 0], sizes = [2, 32], strides = [1, 1]} : vector<2x64xf32> to vector<2x32xf32>
    %225 = arith.index_cast %c3_i32 : i32 to index
    %c0_72 = arith.constant 0 : index
    %c0_73 = arith.constant 0 : index
    %226 = vector.load %arg12[%225, %c0_72, %c0_73] : memref<8x2x64xf32, #tpu.memory_space<vmem>>, vector<1x2x32xf32>
    %227 = vector.shape_cast %226 : vector<1x2x32xf32> to vector<2x32xf32>
    %228 = vector.shape_cast %224 : vector<2x32xf32> to vector<1x2x32xf32>
    tpu.vector_store %arg12[%225, %c0_72, %c0_73], %228 {strides = array<i32>} : memref<8x2x64xf32, #tpu.memory_space<vmem>>, vector<1x2x32xf32>,
    %229 = vector.extract_strided_slice %214 {offsets = [0, 32], sizes = [2, 32], strides = [1, 1]} : vector<2x64xf32> to vector<2x32xf32>
    %c7_i32_74 = arith.constant 7 : i32
    %230 = arith.subi %c7_i32_74, %c3_i32 : i32
    %231 = arith.index_cast %230 : i32 to index
    %c0_75 = arith.constant 0 : index
    %c32_76 = arith.constant 32 : index
    %232 = vector.load %arg12[%231, %c0_75, %c32_76] : memref<8x2x64xf32, #tpu.memory_space<vmem>>, vector<1x2x32xf32>
    %233 = vector.shape_cast %232 : vector<1x2x32xf32> to vector<2x32xf32>
    %234 = vector.shape_cast %229 : vector<2x32xf32> to vector<1x2x32xf32>
    tpu.vector_store %arg12[%231, %c0_75, %c32_76], %234 {strides = array<i32>} : memref<8x2x64xf32, #tpu.memory_space<vmem>>, vector<1x2x32xf32>,
    %c4_i32 = arith.constant 4 : i32
    %235 = arith.index_cast %c4_i32 : i32 to index
    %c0_77 = arith.constant 0 : index
    %c0_78 = arith.constant 0 : index
    %236 = vector.load %arg11[%235, %c0_77, %c0_78] : memref<8x2x256xf32, #tpu.memory_space<vmem>>, vector<1x2x256xf32>
    %237 = vector.shape_cast %236 : vector<1x2x256xf32> to vector<2x256xf32>
    %238 = arith.truncf %218 : vector<2x64xf32> to vector<2x64xbf16>
    %c0_79 = arith.constant 0 : index
    %c0_80 = arith.constant 0 : index
    %239 = vector.load %arg4[%c0_79, %c0_80] : memref<64x256xbf16, #tpu.memory_space<vmem>>, vector<64x256xbf16>
    %cst_81 = arith.constant dense<0.000000e+00> : vector<2x256xf32>
    %240 = tpu.matmul %238, %239, %cst_81 {dimension_numbers = #tpu.dot_dimension_numbers<[1], [0], [0], [1], [0, 0, 1, 1], [], []>} : vector<2x64xbf16>, vector<64x256xbf16>, vector<2x256xf32> -> vector<2x256xf32>
    %241 = arith.addf %237, %240 : vector<2x256xf32>
    %242 = vector.extract_strided_slice %241 {offsets = [0, 0], sizes = [2, 64], strides = [1, 1]} : vector<2x256xf32> to vector<2x64xf32>
    %243 = arith.negf %242 : vector<2x64xf32>
    %244 = math.exp %243 : vector<2x64xf32>
    %cst_82 = arith.constant 1.000000e+00 : f32
    %245 = vector.broadcast %cst_82 : f32 to vector<2x64xf32>
    %246 = arith.addf %245, %244 : vector<2x64xf32>
    %247 = arith.divf %245, %246 : vector<2x64xf32>
    %248 = vector.extract_strided_slice %241 {offsets = [0, 64], sizes = [2, 64], strides = [1, 1]} : vector<2x256xf32> to vector<2x64xf32>
    %249 = arith.negf %248 : vector<2x64xf32>
    %250 = math.exp %249 : vector<2x64xf32>
    %cst_83 = arith.constant 1.000000e+00 : f32
    %251 = vector.broadcast %cst_83 : f32 to vector<2x64xf32>
    %252 = arith.addf %251, %250 : vector<2x64xf32>
    %253 = arith.divf %251, %252 : vector<2x64xf32>
    %254 = vector.extract_strided_slice %241 {offsets = [0, 128], sizes = [2, 64], strides = [1, 1]} : vector<2x256xf32> to vector<2x64xf32>
    %255 = math.tanh %254 : vector<2x64xf32>
    %256 = vector.extract_strided_slice %241 {offsets = [0, 192], sizes = [2, 64], strides = [1, 1]} : vector<2x256xf32> to vector<2x64xf32>
    %257 = arith.negf %256 : vector<2x64xf32>
    %258 = math.exp %257 : vector<2x64xf32>
    %cst_84 = arith.constant 1.000000e+00 : f32
    %259 = vector.broadcast %cst_84 : f32 to vector<2x64xf32>
    %260 = arith.addf %259, %258 : vector<2x64xf32>
    %261 = arith.divf %259, %260 : vector<2x64xf32>
    %262 = arith.mulf %253, %223 : vector<2x64xf32>
    %263 = arith.mulf %247, %255 : vector<2x64xf32>
    %264 = arith.addf %262, %263 : vector<2x64xf32>
    %265 = math.tanh %264 : vector<2x64xf32>
    %266 = arith.mulf %261, %265 : vector<2x64xf32>
    %267 = arith.index_cast %c4_i32 : i32 to index
    %c0_85 = arith.constant 0 : index
    %c0_86 = arith.constant 0 : index
    %268 = vector.load %arg1[%267, %c0_85, %c0_86] : memref<8x2x64xf32, #tpu.memory_space<vmem>>, vector<1x2x64xf32>
    %269 = vector.shape_cast %268 : vector<1x2x64xf32> to vector<2x64xf32>
    %270 = arith.mulf %269, %266 : vector<2x64xf32>
    %cst_87 = arith.constant 1.000000e+00 : f32
    %271 = vector.broadcast %cst_87 : f32 to vector<2x64xf32>
    %272 = arith.subf %271, %269 : vector<2x64xf32>
    %273 = arith.mulf %272, %218 : vector<2x64xf32>
    %274 = arith.addf %270, %273 : vector<2x64xf32>
    %275 = arith.mulf %269, %264 : vector<2x64xf32>
    %cst_88 = arith.constant 1.000000e+00 : f32
    %276 = vector.broadcast %cst_88 : f32 to vector<2x64xf32>
    %277 = arith.subf %276, %269 : vector<2x64xf32>
    %278 = arith.mulf %277, %223 : vector<2x64xf32>
    %279 = arith.addf %275, %278 : vector<2x64xf32>
    %280 = vector.extract_strided_slice %270 {offsets = [0, 0], sizes = [2, 32], strides = [1, 1]} : vector<2x64xf32> to vector<2x32xf32>
    %281 = arith.index_cast %c4_i32 : i32 to index
    %c0_89 = arith.constant 0 : index
    %c0_90 = arith.constant 0 : index
    %282 = vector.load %arg12[%281, %c0_89, %c0_90] : memref<8x2x64xf32, #tpu.memory_space<vmem>>, vector<1x2x32xf32>
    %283 = vector.shape_cast %282 : vector<1x2x32xf32> to vector<2x32xf32>
    %284 = vector.shape_cast %280 : vector<2x32xf32> to vector<1x2x32xf32>
    tpu.vector_store %arg12[%281, %c0_89, %c0_90], %284 {strides = array<i32>} : memref<8x2x64xf32, #tpu.memory_space<vmem>>, vector<1x2x32xf32>,
    %285 = vector.extract_strided_slice %270 {offsets = [0, 32], sizes = [2, 32], strides = [1, 1]} : vector<2x64xf32> to vector<2x32xf32>
    %c7_i32_91 = arith.constant 7 : i32
    %286 = arith.subi %c7_i32_91, %c4_i32 : i32
    %287 = arith.index_cast %286 : i32 to index
    %c0_92 = arith.constant 0 : index
    %c32_93 = arith.constant 32 : index
    %288 = vector.load %arg12[%287, %c0_92, %c32_93] : memref<8x2x64xf32, #tpu.memory_space<vmem>>, vector<1x2x32xf32>
    %289 = vector.shape_cast %288 : vector<1x2x32xf32> to vector<2x32xf32>
    %290 = vector.shape_cast %285 : vector<2x32xf32> to vector<1x2x32xf32>
    tpu.vector_store %arg12[%287, %c0_92, %c32_93], %290 {strides = array<i32>} : memref<8x2x64xf32, #tpu.memory_space<vmem>>, vector<1x2x32xf32>,
    %c5_i32 = arith.constant 5 : i32
    %291 = arith.index_cast %c5_i32 : i32 to index
    %c0_94 = arith.constant 0 : index
    %c0_95 = arith.constant 0 : index
    %292 = vector.load %arg11[%291, %c0_94, %c0_95] : memref<8x2x256xf32, #tpu.memory_space<vmem>>, vector<1x2x256xf32>
    %293 = vector.shape_cast %292 : vector<1x2x256xf32> to vector<2x256xf32>
    %294 = arith.truncf %274 : vector<2x64xf32> to vector<2x64xbf16>
    %c0_96 = arith.constant 0 : index
    %c0_97 = arith.constant 0 : index
    %295 = vector.load %arg4[%c0_96, %c0_97] : memref<64x256xbf16, #tpu.memory_space<vmem>>, vector<64x256xbf16>
    %cst_98 = arith.constant dense<0.000000e+00> : vector<2x256xf32>
    %296 = tpu.matmul %294, %295, %cst_98 {dimension_numbers = #tpu.dot_dimension_numbers<[1], [0], [0], [1], [0, 0, 1, 1], [], []>} : vector<2x64xbf16>, vector<64x256xbf16>, vector<2x256xf32> -> vector<2x256xf32>
    %297 = arith.addf %293, %296 : vector<2x256xf32>
    %298 = vector.extract_strided_slice %297 {offsets = [0, 0], sizes = [2, 64], strides = [1, 1]} : vector<2x256xf32> to vector<2x64xf32>
    %299 = arith.negf %298 : vector<2x64xf32>
    %300 = math.exp %299 : vector<2x64xf32>
    %cst_99 = arith.constant 1.000000e+00 : f32
    %301 = vector.broadcast %cst_99 : f32 to vector<2x64xf32>
    %302 = arith.addf %301, %300 : vector<2x64xf32>
    %303 = arith.divf %301, %302 : vector<2x64xf32>
    %304 = vector.extract_strided_slice %297 {offsets = [0, 64], sizes = [2, 64], strides = [1, 1]} : vector<2x256xf32> to vector<2x64xf32>
    %305 = arith.negf %304 : vector<2x64xf32>
    %306 = math.exp %305 : vector<2x64xf32>
    %cst_100 = arith.constant 1.000000e+00 : f32
    %307 = vector.broadcast %cst_100 : f32 to vector<2x64xf32>
    %308 = arith.addf %307, %306 : vector<2x64xf32>
    %309 = arith.divf %307, %308 : vector<2x64xf32>
    %310 = vector.extract_strided_slice %297 {offsets = [0, 128], sizes = [2, 64], strides = [1, 1]} : vector<2x256xf32> to vector<2x64xf32>
    %311 = math.tanh %310 : vector<2x64xf32>
    %312 = vector.extract_strided_slice %297 {offsets = [0, 192], sizes = [2, 64], strides = [1, 1]} : vector<2x256xf32> to vector<2x64xf32>
    %313 = arith.negf %312 : vector<2x64xf32>
    %314 = math.exp %313 : vector<2x64xf32>
    %cst_101 = arith.constant 1.000000e+00 : f32
    %315 = vector.broadcast %cst_101 : f32 to vector<2x64xf32>
    %316 = arith.addf %315, %314 : vector<2x64xf32>
    %317 = arith.divf %315, %316 : vector<2x64xf32>
    %318 = arith.mulf %309, %279 : vector<2x64xf32>
    %319 = arith.mulf %303, %311 : vector<2x64xf32>
    %320 = arith.addf %318, %319 : vector<2x64xf32>
    %321 = math.tanh %320 : vector<2x64xf32>
    %322 = arith.mulf %317, %321 : vector<2x64xf32>
    %323 = arith.index_cast %c5_i32 : i32 to index
    %c0_102 = arith.constant 0 : index
    %c0_103 = arith.constant 0 : index
    %324 = vector.load %arg1[%323, %c0_102, %c0_103] : memref<8x2x64xf32, #tpu.memory_space<vmem>>, vector<1x2x64xf32>
    %325 = vector.shape_cast %324 : vector<1x2x64xf32> to vector<2x64xf32>
    %326 = arith.mulf %325, %322 : vector<2x64xf32>
    %cst_104 = arith.constant 1.000000e+00 : f32
    %327 = vector.broadcast %cst_104 : f32 to vector<2x64xf32>
    %328 = arith.subf %327, %325 : vector<2x64xf32>
    %329 = arith.mulf %328, %274 : vector<2x64xf32>
    %330 = arith.addf %326, %329 : vector<2x64xf32>
    %331 = arith.mulf %325, %320 : vector<2x64xf32>
    %cst_105 = arith.constant 1.000000e+00 : f32
    %332 = vector.broadcast %cst_105 : f32 to vector<2x64xf32>
    %333 = arith.subf %332, %325 : vector<2x64xf32>
    %334 = arith.mulf %333, %279 : vector<2x64xf32>
    %335 = arith.addf %331, %334 : vector<2x64xf32>
    %336 = vector.extract_strided_slice %326 {offsets = [0, 0], sizes = [2, 32], strides = [1, 1]} : vector<2x64xf32> to vector<2x32xf32>
    %337 = arith.index_cast %c5_i32 : i32 to index
    %c0_106 = arith.constant 0 : index
    %c0_107 = arith.constant 0 : index
    %338 = vector.load %arg12[%337, %c0_106, %c0_107] : memref<8x2x64xf32, #tpu.memory_space<vmem>>, vector<1x2x32xf32>
    %339 = vector.shape_cast %338 : vector<1x2x32xf32> to vector<2x32xf32>
    %340 = vector.shape_cast %336 : vector<2x32xf32> to vector<1x2x32xf32>
    tpu.vector_store %arg12[%337, %c0_106, %c0_107], %340 {strides = array<i32>} : memref<8x2x64xf32, #tpu.memory_space<vmem>>, vector<1x2x32xf32>,
    %341 = vector.extract_strided_slice %326 {offsets = [0, 32], sizes = [2, 32], strides = [1, 1]} : vector<2x64xf32> to vector<2x32xf32>
    %c7_i32_108 = arith.constant 7 : i32
    %342 = arith.subi %c7_i32_108, %c5_i32 : i32
    %343 = arith.index_cast %342 : i32 to index
    %c0_109 = arith.constant 0 : index
    %c32_110 = arith.constant 32 : index
    %344 = vector.load %arg12[%343, %c0_109, %c32_110] : memref<8x2x64xf32, #tpu.memory_space<vmem>>, vector<1x2x32xf32>
    %345 = vector.shape_cast %344 : vector<1x2x32xf32> to vector<2x32xf32>
    %346 = vector.shape_cast %341 : vector<2x32xf32> to vector<1x2x32xf32>
    tpu.vector_store %arg12[%343, %c0_109, %c32_110], %346 {strides = array<i32>} : memref<8x2x64xf32, #tpu.memory_space<vmem>>, vector<1x2x32xf32>,
    %c6_i32 = arith.constant 6 : i32
    %347 = arith.index_cast %c6_i32 : i32 to index
    %c0_111 = arith.constant 0 : index
    %c0_112 = arith.constant 0 : index
    %348 = vector.load %arg11[%347, %c0_111, %c0_112] : memref<8x2x256xf32, #tpu.memory_space<vmem>>, vector<1x2x256xf32>
    %349 = vector.shape_cast %348 : vector<1x2x256xf32> to vector<2x256xf32>
    %350 = arith.truncf %330 : vector<2x64xf32> to vector<2x64xbf16>
    %c0_113 = arith.constant 0 : index
    %c0_114 = arith.constant 0 : index
    %351 = vector.load %arg4[%c0_113, %c0_114] : memref<64x256xbf16, #tpu.memory_space<vmem>>, vector<64x256xbf16>
    %cst_115 = arith.constant dense<0.000000e+00> : vector<2x256xf32>
    %352 = tpu.matmul %350, %351, %cst_115 {dimension_numbers = #tpu.dot_dimension_numbers<[1], [0], [0], [1], [0, 0, 1, 1], [], []>} : vector<2x64xbf16>, vector<64x256xbf16>, vector<2x256xf32> -> vector<2x256xf32>
    %353 = arith.addf %349, %352 : vector<2x256xf32>
    %354 = vector.extract_strided_slice %353 {offsets = [0, 0], sizes = [2, 64], strides = [1, 1]} : vector<2x256xf32> to vector<2x64xf32>
    %355 = arith.negf %354 : vector<2x64xf32>
    %356 = math.exp %355 : vector<2x64xf32>
    %cst_116 = arith.constant 1.000000e+00 : f32
    %357 = vector.broadcast %cst_116 : f32 to vector<2x64xf32>
    %358 = arith.addf %357, %356 : vector<2x64xf32>
    %359 = arith.divf %357, %358 : vector<2x64xf32>
    %360 = vector.extract_strided_slice %353 {offsets = [0, 64], sizes = [2, 64], strides = [1, 1]} : vector<2x256xf32> to vector<2x64xf32>
    %361 = arith.negf %360 : vector<2x64xf32>
    %362 = math.exp %361 : vector<2x64xf32>
    %cst_117 = arith.constant 1.000000e+00 : f32
    %363 = vector.broadcast %cst_117 : f32 to vector<2x64xf32>
    %364 = arith.addf %363, %362 : vector<2x64xf32>
    %365 = arith.divf %363, %364 : vector<2x64xf32>
    %366 = vector.extract_strided_slice %353 {offsets = [0, 128], sizes = [2, 64], strides = [1, 1]} : vector<2x256xf32> to vector<2x64xf32>
    %367 = math.tanh %366 : vector<2x64xf32>
    %368 = vector.extract_strided_slice %353 {offsets = [0, 192], sizes = [2, 64], strides = [1, 1]} : vector<2x256xf32> to vector<2x64xf32>
    %369 = arith.negf %368 : vector<2x64xf32>
    %370 = math.exp %369 : vector<2x64xf32>
    %cst_118 = arith.constant 1.000000e+00 : f32
    %371 = vector.broadcast %cst_118 : f32 to vector<2x64xf32>
    %372 = arith.addf %371, %370 : vector<2x64xf32>
    %373 = arith.divf %371, %372 : vector<2x64xf32>
    %374 = arith.mulf %365, %335 : vector<2x64xf32>
    %375 = arith.mulf %359, %367 : vector<2x64xf32>
    %376 = arith.addf %374, %375 : vector<2x64xf32>
    %377 = math.tanh %376 : vector<2x64xf32>
    %378 = arith.mulf %373, %377 : vector<2x64xf32>
    %379 = arith.index_cast %c6_i32 : i32 to index
    %c0_119 = arith.constant 0 : index
    %c0_120 = arith.constant 0 : index
    %380 = vector.load %arg1[%379, %c0_119, %c0_120] : memref<8x2x64xf32, #tpu.memory_space<vmem>>, vector<1x2x64xf32>
    %381 = vector.shape_cast %380 : vector<1x2x64xf32> to vector<2x64xf32>
    %382 = arith.mulf %381, %378 : vector<2x64xf32>
    %cst_121 = arith.constant 1.000000e+00 : f32
    %383 = vector.broadcast %cst_121 : f32 to vector<2x64xf32>
    %384 = arith.subf %383, %381 : vector<2x64xf32>
    %385 = arith.mulf %384, %330 : vector<2x64xf32>
    %386 = arith.addf %382, %385 : vector<2x64xf32>
    %387 = arith.mulf %381, %376 : vector<2x64xf32>
    %cst_122 = arith.constant 1.000000e+00 : f32
    %388 = vector.broadcast %cst_122 : f32 to vector<2x64xf32>
    %389 = arith.subf %388, %381 : vector<2x64xf32>
    %390 = arith.mulf %389, %335 : vector<2x64xf32>
    %391 = arith.addf %387, %390 : vector<2x64xf32>
    %392 = vector.extract_strided_slice %382 {offsets = [0, 0], sizes = [2, 32], strides = [1, 1]} : vector<2x64xf32> to vector<2x32xf32>
    %393 = arith.index_cast %c6_i32 : i32 to index
    %c0_123 = arith.constant 0 : index
    %c0_124 = arith.constant 0 : index
    %394 = vector.load %arg12[%393, %c0_123, %c0_124] : memref<8x2x64xf32, #tpu.memory_space<vmem>>, vector<1x2x32xf32>
    %395 = vector.shape_cast %394 : vector<1x2x32xf32> to vector<2x32xf32>
    %396 = vector.shape_cast %392 : vector<2x32xf32> to vector<1x2x32xf32>
    tpu.vector_store %arg12[%393, %c0_123, %c0_124], %396 {strides = array<i32>} : memref<8x2x64xf32, #tpu.memory_space<vmem>>, vector<1x2x32xf32>,
    %397 = vector.extract_strided_slice %382 {offsets = [0, 32], sizes = [2, 32], strides = [1, 1]} : vector<2x64xf32> to vector<2x32xf32>
    %c7_i32_125 = arith.constant 7 : i32
    %398 = arith.subi %c7_i32_125, %c6_i32 : i32
    %399 = arith.index_cast %398 : i32 to index
    %c0_126 = arith.constant 0 : index
    %c32_127 = arith.constant 32 : index
    %400 = vector.load %arg12[%399, %c0_126, %c32_127] : memref<8x2x64xf32, #tpu.memory_space<vmem>>, vector<1x2x32xf32>
    %401 = vector.shape_cast %400 : vector<1x2x32xf32> to vector<2x32xf32>
    %402 = vector.shape_cast %397 : vector<2x32xf32> to vector<1x2x32xf32>
    tpu.vector_store %arg12[%399, %c0_126, %c32_127], %402 {strides = array<i32>} : memref<8x2x64xf32, #tpu.memory_space<vmem>>, vector<1x2x32xf32>,
    %c7_i32_128 = arith.constant 7 : i32
    %403 = arith.index_cast %c7_i32_128 : i32 to index
    %c0_129 = arith.constant 0 : index
    %c0_130 = arith.constant 0 : index
    %404 = vector.load %arg11[%403, %c0_129, %c0_130] : memref<8x2x256xf32, #tpu.memory_space<vmem>>, vector<1x2x256xf32>
    %405 = vector.shape_cast %404 : vector<1x2x256xf32> to vector<2x256xf32>
    %406 = arith.truncf %386 : vector<2x64xf32> to vector<2x64xbf16>
    %c0_131 = arith.constant 0 : index
    %c0_132 = arith.constant 0 : index
    %407 = vector.load %arg4[%c0_131, %c0_132] : memref<64x256xbf16, #tpu.memory_space<vmem>>, vector<64x256xbf16>
    %cst_133 = arith.constant dense<0.000000e+00> : vector<2x256xf32>
    %408 = tpu.matmul %406, %407, %cst_133 {dimension_numbers = #tpu.dot_dimension_numbers<[1], [0], [0], [1], [0, 0, 1, 1], [], []>} : vector<2x64xbf16>, vector<64x256xbf16>, vector<2x256xf32> -> vector<2x256xf32>
    %409 = arith.addf %405, %408 : vector<2x256xf32>
    %410 = vector.extract_strided_slice %409 {offsets = [0, 0], sizes = [2, 64], strides = [1, 1]} : vector<2x256xf32> to vector<2x64xf32>
    %411 = arith.negf %410 : vector<2x64xf32>
    %412 = math.exp %411 : vector<2x64xf32>
    %cst_134 = arith.constant 1.000000e+00 : f32
    %413 = vector.broadcast %cst_134 : f32 to vector<2x64xf32>
    %414 = arith.addf %413, %412 : vector<2x64xf32>
    %415 = arith.divf %413, %414 : vector<2x64xf32>
    %416 = vector.extract_strided_slice %409 {offsets = [0, 64], sizes = [2, 64], strides = [1, 1]} : vector<2x256xf32> to vector<2x64xf32>
    %417 = arith.negf %416 : vector<2x64xf32>
    %418 = math.exp %417 : vector<2x64xf32>
    %cst_135 = arith.constant 1.000000e+00 : f32
    %419 = vector.broadcast %cst_135 : f32 to vector<2x64xf32>
    %420 = arith.addf %419, %418 : vector<2x64xf32>
    %421 = arith.divf %419, %420 : vector<2x64xf32>
    %422 = vector.extract_strided_slice %409 {offsets = [0, 128], sizes = [2, 64], strides = [1, 1]} : vector<2x256xf32> to vector<2x64xf32>
    %423 = math.tanh %422 : vector<2x64xf32>
    %424 = vector.extract_strided_slice %409 {offsets = [0, 192], sizes = [2, 64], strides = [1, 1]} : vector<2x256xf32> to vector<2x64xf32>
    %425 = arith.negf %424 : vector<2x64xf32>
    %426 = math.exp %425 : vector<2x64xf32>
    %cst_136 = arith.constant 1.000000e+00 : f32
    %427 = vector.broadcast %cst_136 : f32 to vector<2x64xf32>
    %428 = arith.addf %427, %426 : vector<2x64xf32>
    %429 = arith.divf %427, %428 : vector<2x64xf32>
    %430 = arith.mulf %421, %391 : vector<2x64xf32>
    %431 = arith.mulf %415, %423 : vector<2x64xf32>
    %432 = arith.addf %430, %431 : vector<2x64xf32>
    %433 = math.tanh %432 : vector<2x64xf32>
    %434 = arith.mulf %429, %433 : vector<2x64xf32>
    %435 = arith.index_cast %c7_i32_128 : i32 to index
    %c0_137 = arith.constant 0 : index
    %c0_138 = arith.constant 0 : index
    %436 = vector.load %arg1[%435, %c0_137, %c0_138] : memref<8x2x64xf32, #tpu.memory_space<vmem>>, vector<1x2x64xf32>
    %437 = vector.shape_cast %436 : vector<1x2x64xf32> to vector<2x64xf32>
    %438 = arith.mulf %437, %434 : vector<2x64xf32>
    %cst_139 = arith.constant 1.000000e+00 : f32
    %439 = vector.broadcast %cst_139 : f32 to vector<2x64xf32>
    %440 = arith.subf %439, %437 : vector<2x64xf32>
    %441 = arith.mulf %440, %386 : vector<2x64xf32>
    %442 = arith.addf %438, %441 : vector<2x64xf32>
    %443 = arith.mulf %437, %432 : vector<2x64xf32>
    %cst_140 = arith.constant 1.000000e+00 : f32
    %444 = vector.broadcast %cst_140 : f32 to vector<2x64xf32>
    %445 = arith.subf %444, %437 : vector<2x64xf32>
    %446 = arith.mulf %445, %391 : vector<2x64xf32>
    %447 = arith.addf %443, %446 : vector<2x64xf32>
    %448 = vector.extract_strided_slice %438 {offsets = [0, 0], sizes = [2, 32], strides = [1, 1]} : vector<2x64xf32> to vector<2x32xf32>
    %449 = arith.index_cast %c7_i32_128 : i32 to index
    %c0_141 = arith.constant 0 : index
    %c0_142 = arith.constant 0 : index
    %450 = vector.load %arg12[%449, %c0_141, %c0_142] : memref<8x2x64xf32, #tpu.memory_space<vmem>>, vector<1x2x32xf32>
    %451 = vector.shape_cast %450 : vector<1x2x32xf32> to vector<2x32xf32>
    %452 = vector.shape_cast %448 : vector<2x32xf32> to vector<1x2x32xf32>
    tpu.vector_store %arg12[%449, %c0_141, %c0_142], %452 {strides = array<i32>} : memref<8x2x64xf32, #tpu.memory_space<vmem>>, vector<1x2x32xf32>,
    %453 = vector.extract_strided_slice %438 {offsets = [0, 32], sizes = [2, 32], strides = [1, 1]} : vector<2x64xf32> to vector<2x32xf32>
    %c7_i32_143 = arith.constant 7 : i32
    %454 = arith.subi %c7_i32_143, %c7_i32_128 : i32
    %455 = arith.index_cast %454 : i32 to index
    %c0_144 = arith.constant 0 : index
    %c32_145 = arith.constant 32 : index
    %456 = vector.load %arg12[%455, %c0_144, %c32_145] : memref<8x2x64xf32, #tpu.memory_space<vmem>>, vector<1x2x32xf32>
    %457 = vector.shape_cast %456 : vector<1x2x32xf32> to vector<2x32xf32>
    %458 = vector.shape_cast %453 : vector<2x32xf32> to vector<1x2x32xf32>
    tpu.vector_store %arg12[%455, %c0_144, %c32_145], %458 {strides = array<i32>} : memref<8x2x64xf32, #tpu.memory_space<vmem>>, vector<1x2x32xf32>,
    %c8_i32 = arith.constant 8 : i32
    %c0_146 = arith.constant 0 : index
    %c0_147 = arith.constant 0 : index
    %c0_148 = arith.constant 0 : index
    %459 = vector.load %arg12[%c0_146, %c0_147, %c0_148] : memref<8x2x64xf32, #tpu.memory_space<vmem>>, vector<8x2x64xf32>
    %460 = vector.shape_cast %459 : vector<8x2x64xf32> to vector<16x64xf32>
    %461 = arith.truncf %460 : vector<16x64xf32> to vector<16x64xbf16>
    %c0_149 = arith.constant 0 : index
    %c0_150 = arith.constant 0 : index
    %462 = vector.load %arg5[%c0_149, %c0_150] : memref<64x128xbf16, #tpu.memory_space<vmem>>, vector<64x128xbf16>
    %cst_151 = arith.constant dense<0.000000e+00> : vector<16x128xf32>
    %463 = tpu.matmul %461, %462, %cst_151 {dimension_numbers = #tpu.dot_dimension_numbers<[1], [0], [0], [1], [0, 0, 1, 1], [], []>} : vector<16x64xbf16>, vector<64x128xbf16>, vector<16x128xf32> -> vector<16x128xf32>
    %c0_152 = arith.constant 0 : index
    %c0_153 = arith.constant 0 : index
    %464 = vector.load %arg6[%c0_152, %c0_153] : memref<1x128xf32, #tpu.memory_space<vmem>>, vector<1x128xf32>
    %465 = vector.broadcast %464 : vector<1x128xf32> to vector<16x128xf32>
    %466 = arith.addf %463, %465 : vector<16x128xf32>
    %467 = vector.shape_cast %466 : vector<16x128xf32> to vector<8x2x128xf32>
    %c0_154 = arith.constant 0 : index
    %c0_155 = arith.constant 0 : index
    %c0_156 = arith.constant 0 : index
    %468 = vector.load %arg9[%c0_154, %c0_155, %c0_156] : memref<8x2x128xf32, #tpu.memory_space<vmem>>, vector<8x2x128xf32>
    tpu.vector_store %arg9[%c0_154, %c0_155, %c0_156], %467 {strides = array<i32>} : memref<8x2x128xf32, #tpu.memory_space<vmem>>, vector<8x2x128xf32>,
    %469 = arith.truncf %442 : vector<2x64xf32> to vector<2x64xbf16>
    %c0_157 = arith.constant 0 : index
    %c0_158 = arith.constant 0 : index
    %470 = vector.load %arg7[%c0_157, %c0_158] : memref<64x128xbf16, #tpu.memory_space<vmem>>, vector<64x128xbf16>
    %cst_159 = arith.constant dense<0.000000e+00> : vector<2x128xf32>
    %471 = tpu.matmul %469, %470, %cst_159 {dimension_numbers = #tpu.dot_dimension_numbers<[1], [0], [0], [1], [0, 0, 1, 1], [], []>} : vector<2x64xbf16>, vector<64x128xbf16>, vector<2x128xf32> -> vector<2x128xf32>
    %c0_160 = arith.constant 0 : index
    %c0_161 = arith.constant 0 : index
    %472 = vector.load %arg8[%c0_160, %c0_161] : memref<1x128xf32, #tpu.memory_space<vmem>>, vector<1x128xf32>
    %473 = vector.broadcast %472 : vector<1x128xf32> to vector<2x128xf32>
    %474 = arith.addf %471, %473 : vector<2x128xf32>
    %c0_162 = arith.constant 0 : index
    %c0_163 = arith.constant 0 : index
    %475 = vector.load %arg10[%c0_162, %c0_163] : memref<2x128xf32, #tpu.memory_space<vmem>>, vector<2x128xf32>
    tpu.vector_store %arg10[%c0_162, %c0_163], %474 {strides = array<i32>} : memref<2x128xf32, #tpu.memory_space<vmem>>, vector<2x128xf32>,
    return
  }
}

</mosaic_0001>

<llo_original>
// kernel: _lambda_.1
$region0: #{_lambda_.1}
  #allocation0 [shape = 'u32[]', space=smem, size = 0x4, offset = 0x4, fixed_abs, tag = 'smem constant byte address 0x4 - core index']
  #allocation1 [shape = 'u32[72,128]{1,0:T(1,128)}', space=vmem, size = 0x9000, scoped, tag = 'internal scratch']
  #allocation2 [shape = 'f32[8,2,256]{2,1,0:T(2,128)}', space=vmem, size = 0x4000, scoped, tag = 'scratch operand']
  #allocation3 [shape = 'f32[8,2,64]{2,1,0:T(2,128)}', space=vmem, size = 0x2000, scoped, tag = 'scratch operand']
  %s0 = inlined_call_operand.vmem [shape: bf16[8,2,64], index: 0, kind: input, shape index: {}]
  %s1 = inlined_call_operand.vmem [shape: f32[8,2,64], index: 1, kind: input, shape index: {}]
  %s2 = inlined_call_operand.vmem [shape: bf16[64,256], index: 2, kind: input, shape index: {}]
  %s3 = inlined_call_operand.vmem [shape: f32[1,256], index: 3, kind: input, shape index: {}]
  %s4 = inlined_call_operand.vmem [shape: bf16[64,256], index: 4, kind: input, shape index: {}]
  %s5 = inlined_call_operand.vmem [shape: bf16[64,128], index: 5, kind: input, shape index: {}]
  %s6 = inlined_call_operand.vmem [shape: f32[1,128], index: 6, kind: input, shape index: {}]
  %s7 = inlined_call_operand.vmem [shape: bf16[64,128], index: 7, kind: input, shape index: {}]
  %s8 = inlined_call_operand.vmem [shape: f32[1,128], index: 8, kind: input, shape index: {}]
  %s9 = inlined_call_operand.vmem [shape: f32[8,2,128], index: 9, kind: output, shape index: {0}]
  %s10 = inlined_call_operand.hbm [shape: f32[2,128], index: 10, kind: output, shape index: {1}]
  %11 = xla_tuple %s9, %s10
  %s12 = sld [smem:[#allocation0]]
  $region54: #{_lambda_.1} parent=0
    _
  %s14 = ssub.s32 1, %s12
  %s15 = scalar_select 0, %s14, %s12
  $region1: #{_lambda_.1} parent=0
    #allocation4 [shape = 'u8[1024]{0}', space=vmem, size = 0x400, scoped, tag = 'output window, operand 1, single buffered']
    #allocation5 [shape = 's32[1]{0}', space=sflag, size = 0x4, scoped, tag = 'scoped memory for _lambda_.1']
    %16 = vsyncpa [#allocation5], 0
    // Predicated region
    $region2: #{_lambda_.1} parent=1 // pred_check
      _
    $region3: #{_lambda_.1} parent=1 // pred_check_branch
      %18 = sbr.rel (0) target = $region5
    $region4: #{_lambda_.1} parent=1 // pred_region
      _
    $region5: #{_lambda_.1} parent=1 // pred_fallthru
      _
    // Predicated region
    $region6: #{_lambda_.1} parent=1 // pred_check
      _
    $region7: #{_lambda_.1} parent=1 // pred_check_branch
      %20 = sbr.rel (0) target = $region9
    $region8: #{_lambda_.1} parent=1 // pred_region
      _
    $region9: #{_lambda_.1} parent=1 // pred_fallthru
      _
    // Predicated region
    $region10: #{_lambda_.1} parent=1 // pred_check
      _
    $region11: #{_lambda_.1} parent=1 // pred_check_branch
      %22 = sbr.rel (0) target = $region13
    $region12: #{_lambda_.1} parent=1 // pred_region
      _
    $region13: #{_lambda_.1} parent=1 // pred_fallthru
      _
    // Predicated region
    $region14: #{_lambda_.1} parent=1 // pred_check
      _
    $region15: #{_lambda_.1} parent=1 // pred_check_branch
      %24 = sbr.rel (0) target = $region17
    $region16: #{_lambda_.1} parent=1 // pred_region
      _
    $region17: #{_lambda_.1} parent=1 // pred_fallthru
      _
    // Predicated region
    $region18: #{_lambda_.1} parent=1 // pred_check
      _
    $region19: #{_lambda_.1} parent=1 // pred_check_branch
      %26 = sbr.rel (0) target = $region21
    $region20: #{_lambda_.1} parent=1 // pred_region
      _
    $region21: #{_lambda_.1} parent=1 // pred_fallthru
      _
    // Predicated region
    $region22: #{_lambda_.1} parent=1 // pred_check
      _
    $region23: #{_lambda_.1} parent=1 // pred_check_branch
      %28 = sbr.rel (0) target = $region25
    $region24: #{_lambda_.1} parent=1 // pred_region
      _
    $region25: #{_lambda_.1} parent=1 // pred_fallthru
      _
    // Predicated region
    $region26: #{_lambda_.1} parent=1 // pred_check
      _
    $region27: #{_lambda_.1} parent=1 // pred_check_branch
      %30 = sbr.rel (0) target = $region29
    $region28: #{_lambda_.1} parent=1 // pred_region
      _
    $region29: #{_lambda_.1} parent=1 // pred_fallthru
      _
    // Predicated region
    $region30: #{_lambda_.1} parent=1 // pred_check
      _
    $region31: #{_lambda_.1} parent=1 // pred_check_branch
      %32 = sbr.rel (0) target = $region33
    $region32: #{_lambda_.1} parent=1 // pred_region
      _
    $region33: #{_lambda_.1} parent=1 // pred_fallthru
      _
    // Predicated region
    $region34: #{_lambda_.1} parent=1 // pred_check
      _
    $region35: #{_lambda_.1} parent=1 // pred_check_branch
      %34 = sbr.rel (0) target = $region37
    $region36: #{_lambda_.1} parent=1 // pred_region
      _
    $region37: #{_lambda_.1} parent=1 // pred_fallthru
      _
    %v36 = vld [vmem:[%s0] sm:$0x1]
    %v37 = vld [vmem:[%s0 + $0x1] sm:$0x1]
    %v38 = vld [vmem:[%s0 + $0x2] sm:$0x1]
    %v39 = vld [vmem:[%s0 + $0x3] sm:$0x1]
    %v40 = vld [vmem:[%s0 + $0x4] sm:$0x1]
    %v41 = vld [vmem:[%s0 + $0x5] sm:$0x1]
    %v42 = vld [vmem:[%s0 + $0x6] sm:$0x1]
    %v43 = vld [vmem:[%s0 + $0x7] sm:$0x1]
    %v44 = vld [vmem:[%s2] sm:$0xff]
    %v45 = vld [vmem:[%s2 + $0x8] sm:$0xff]
    %v46 = vld [vmem:[%s2 + $0x10] sm:$0xff]
    %v47 = vld [vmem:[%s2 + $0x18] sm:$0xff]
    %v48 = vld [vmem:[%s2 + $0x20] sm:$0xff]
    %v49 = vld [vmem:[%s2 + $0x28] sm:$0xff]
    %v50 = vld [vmem:[%s2 + $0x30] sm:$0xff]
    %v51 = vld [vmem:[%s2 + $0x38] sm:$0xff]
    %v52 = vld [vmem:[%s3] sm:$0x3]
    %v54 = vperm.slane %v52, 0
    %v55 = vperm.slane %v52, 1
    %59 = vst [vmem:[#allocation1] ss:$9 sm:$0xff] %v36
    %s61 = scalar_lea.vmem [#allocation1], 1
    %62 = vst [vmem:[%s61] ss:$9 sm:$0xff] %v37
    %s64 = scalar_lea.vmem [#allocation1], 2
    %65 = vst [vmem:[%s64] ss:$9 sm:$0xff] %v38
    %s67 = scalar_lea.vmem [#allocation1], 3
    %68 = vst [vmem:[%s67] ss:$9 sm:$0xff] %v39
    %s70 = scalar_lea.vmem [#allocation1], 4
    %71 = vst [vmem:[%s70] ss:$9 sm:$0xff] %v40
    %s73 = scalar_lea.vmem [#allocation1], 5
    %74 = vst [vmem:[%s73] ss:$9 sm:$0xff] %v41
    %s76 = scalar_lea.vmem [#allocation1], 6
    %77 = vst [vmem:[%s76] ss:$9 sm:$0xff] %v42
    %s79 = scalar_lea.vmem [#allocation1], 7
    %80 = vst [vmem:[%s79] ss:$9 sm:$0xff] %v43
    %v81 = vld [vmem:[#allocation1] sm:$0xff]
    %v90 = vunpack.c.l.b16 %v44
    %v91 = vunpack.c.h.b16 %v44
    %v92 = vunpack.c.l.b16 %v45
    %v93 = vunpack.c.h.b16 %v45
    %v94 = vunpack.c.l.b16 %v46
    %v95 = vunpack.c.h.b16 %v46
    %v96 = vunpack.c.l.b16 %v47
    %v97 = vunpack.c.h.b16 %v47
    %v98 = vunpack.c.l.b16 %v48
    %v99 = vunpack.c.h.b16 %v48
    %v100 = vunpack.c.l.b16 %v49
    %v101 = vunpack.c.h.b16 %v49
    %v102 = vunpack.c.l.b16 %v50
    %v103 = vunpack.c.h.b16 %v50
    %v104 = vunpack.c.l.b16 %v51
    %v105 = vunpack.c.h.b16 %v51
    %v106 = vpack.c.b16 %v92, %v90
    %v107 = vpack.c.b16 %v93, %v91
    %v108 = vpack.c.b16 %v96, %v94
    %v109 = vpack.c.b16 %v97, %v95
    %v110 = vpack.c.b16 %v100, %v98
    %v111 = vpack.c.b16 %v101, %v99
    %v112 = vpack.c.b16 %v104, %v102
    %v113 = vpack.c.b16 %v105, %v103
    %vm122 = vcmask 523264
    %v123 = vsel %vm122, %v81, 0
    %125 = vmatpush.bf16.msra.mxu0 0
    %126 = vmatpush.bf16.msra.mxu0 0
    %127 = vmatpush.bf16.msra.mxu0 0
    %128 = vmatpush.bf16.msra.mxu0 0
    %129 = vmatpush.bf16.msra.mxu0 %v112
    %130 = vmatpush.bf16.msra.mxu0 %v110
    %131 = vmatpush.bf16.msra.mxu0 %v108
    %132 = vmatpush.bf16.msra.mxu0 %v106
    %133 = vmatmul.bf16.gmra.mxu0 %v123
    %v134 = vpop.f32.mrf.mxu0
    %v135 = vadd.f32 %v54, %v134
    %v136 = vpop.f32.mrf.mxu0
    %v137 = vadd.f32 %v54, %v136
    %138 = vdwg.mxu0
    %139 = vmatpush.bf16.msra.mxu0 0
    %140 = vmatpush.bf16.msra.mxu0 0
    %141 = vmatpush.bf16.msra.mxu0 0
    %142 = vmatpush.bf16.msra.mxu0 0
    %143 = vmatpush.bf16.msra.mxu0 %v113
    %144 = vmatpush.bf16.msra.mxu0 %v111
    %145 = vmatpush.bf16.msra.mxu0 %v109
    %146 = vmatpush.bf16.msra.mxu0 %v107
    %147 = vmatmul.bf16.gmra.mxu0 %v123
    %v148 = vpop.f32.mrf.mxu0
    %v149 = vadd.f32 %v55, %v148
    %v150 = vpop.f32.mrf.mxu0
    %v151 = vadd.f32 %v55, %v150
    %152 = vdwg.mxu0
    %v157 = vrot.slane %v149, 6
    %v158 = vrot.slane %v151, 6
    %vm159 = vcmask 1041408
    %v160 = vsel %vm159, %v135, %v157
    %vm161 = vcmask 1043458
    %v162 = vsel %vm161, %v135, %v157
    %v163 = vrot.slane %v162, 2
    %vm164 = vcmask 1045508
    %v165 = vsel %vm164, %v135, %v157
    %v166 = vrot.slane %v165, 4
    %vm167 = vcmask 1045504
    %v168 = vsel %vm167, %v157, %v135
    %v169 = vrot.slane %v168, 6
    %v170 = vsel %vm159, %v137, %v158
    %v171 = vsel %vm161, %v137, %v158
    %v172 = vrot.slane %v171, 2
    %v173 = vsel %vm164, %v137, %v158
    %v174 = vrot.slane %v173, 4
    %v175 = vsel %vm167, %v158, %v137
    %v176 = vrot.slane %v175, 6
    %185 = vst [vmem:[#allocation2] sm:$0xf] %v160
    %186 = vst [vmem:[#allocation2 + $0x4] sm:$0xf] %v163
    %187 = vst [vmem:[#allocation2 + $0x8] sm:$0xf] %v166
    %188 = vst [vmem:[#allocation2 + $0xc] sm:$0xf] %v169
    %189 = vst [vmem:[#allocation2 + $0x10] sm:$0xf] %v170
    %190 = vst [vmem:[#allocation2 + $0x14] sm:$0xf] %v172
    %191 = vst [vmem:[#allocation2 + $0x18] sm:$0xf] %v174
    %192 = vst [vmem:[#allocation2 + $0x1c] sm:$0xf] %v176
    %v193 = vld [vmem:[#allocation2] sm:$0xf]
    %v194 = vld [vmem:[%s4] sm:$0xff]
    %v195 = vld [vmem:[%s4 + $0x8] sm:$0xff]
    %v196 = vld [vmem:[%s4 + $0x10] sm:$0xff]
    %v197 = vld [vmem:[%s4 + $0x18] sm:$0xff]
    %v198 = vld [vmem:[%s4 + $0x20] sm:$0xff]
    %v199 = vld [vmem:[%s4 + $0x28] sm:$0xff]
    %v200 = vld [vmem:[%s4 + $0x30] sm:$0xff]
    %v201 = vld [vmem:[%s4 + $0x38] sm:$0xff]
    %v210 = vunpack.c.l.b16 %v194
    %v211 = vunpack.c.h.b16 %v194
    %v212 = vunpack.c.l.b16 %v195
    %v213 = vunpack.c.h.b16 %v195
    %v214 = vunpack.c.l.b16 %v196
    %v215 = vunpack.c.h.b16 %v196
    %v216 = vunpack.c.l.b16 %v197
    %v217 = vunpack.c.h.b16 %v197
    %v218 = vunpack.c.l.b16 %v198
    %v219 = vunpack.c.h.b16 %v198
    %v220 = vunpack.c.l.b16 %v199
    %v221 = vunpack.c.h.b16 %v199
    %v222 = vunpack.c.l.b16 %v200
    %v223 = vunpack.c.h.b16 %v200
    %v224 = vunpack.c.l.b16 %v201
    %v225 = vunpack.c.h.b16 %v201
    %v226 = vpack.c.b16 %v212, %v210
    %v227 = vpack.c.b16 %v213, %v211
    %v228 = vpack.c.b16 %v216, %v214
    %v229 = vpack.c.b16 %v217, %v215
    %v230 = vpack.c.b16 %v220, %v218
    %v231 = vpack.c.b16 %v221, %v219
    %v232 = vpack.c.b16 %v224, %v222
    %v233 = vpack.c.b16 %v225, %v223
    %v243 = vsel %vm122, 0, 0
    %245 = vmatpush.bf16.msra.mxu0 0
    %246 = vmatpush.bf16.msra.mxu0 0
    %247 = vmatpush.bf16.msra.mxu0 0
    %248 = vmatpush.bf16.msra.mxu0 0
    %249 = vmatpush.bf16.msra.mxu0 %v232
    %250 = vmatpush.bf16.msra.mxu0 %v230
    %251 = vmatpush.bf16.msra.mxu0 %v228
    %252 = vmatpush.bf16.msra.mxu0 %v226
    %253 = vmatmul.bf16.gmra.mxu0 %v243
    %v254 = vpop.f32.mrf.mxu0
    %v255 = vadd.f32 0.0, %v254
    %v256 = vpop.f32.mrf.mxu0
    %257 = vdwg.mxu0
    %258 = vmatpush.bf16.msra.mxu0 0
    %259 = vmatpush.bf16.msra.mxu0 0
    %260 = vmatpush.bf16.msra.mxu0 0
    %261 = vmatpush.bf16.msra.mxu0 0
    %262 = vmatpush.bf16.msra.mxu0 %v233
    %263 = vmatpush.bf16.msra.mxu0 %v231
    %264 = vmatpush.bf16.msra.mxu0 %v229
    %265 = vmatpush.bf16.msra.mxu0 %v227
    %266 = vmatmul.bf16.gmra.mxu0 %v243
    %v267 = vpop.f32.mrf.mxu0
    %v268 = vadd.f32 0.0, %v267
    %v269 = vpop.f32.mrf.mxu0
    %270 = vdwg.mxu0
    %v273 = vrot.slane %v268, 6
    %v274 = vsel %vm159, %v255, %v273
    %v276 = vadd.f32 %v193, %v274
    %v277 = vxor.u32 %v276, 2147483648
    %v278 = vmul.f32 %v277, 1.442695
    %v279 = vpow.pop %v278
    %v280 = vadd.f32 %v279, 1.0
    %v281 = vrcp.pop %v280
    %v282 = vmul.f32 %v280, %v281
    %v283 = vsub.f32 1.0, %v282
    %v284 = vmul.f32 %v281, %v283
    %v285 = vadd.f32 %v281, %v284
    %vm286 = vweird.f32 %v280
    %vm287 = vweird.f32 %v281
    %vm288 = vmor %vm286, %vm287
    %v289 = vsel %vm288, %v281, %v285
    %v290 = vand.u32 2147483647, %v280
    %vm291 = vcmp.eq.f32.partialorder %v290, 8.507059e+37
    %v292 = vand.u32 %v280, 2147483648
    %v293 = vor.u32 1.1754944e-38, %v292
    %v294 = vsel %vm291, %v293, %v289
    %v295 = vmul.f32 1.0, %v294
    %v297 = vrot.slane %v276, 2
    %v299 = vtanh.pop %v297
    %300 = vrot.lane.b32.xlu0 %v276, 64
    %v301 = vpop.permute.xlu0 %300
    %v302 = vrot.slane %v301, 2
    %v304 = vxor.u32 %v302, 2147483648
    %v305 = vmul.f32 %v304, 1.442695
    %v306 = vpow.pop %v305
    %v307 = vadd.f32 %v306, 1.0
    %v308 = vrcp.pop %v307
    %v309 = vmul.f32 %v307, %v308
    %v310 = vsub.f32 1.0, %v309
    %v311 = vmul.f32 %v308, %v310
    %v312 = vadd.f32 %v308, %v311
    %vm313 = vweird.f32 %v307
    %vm314 = vweird.f32 %v308
    %vm315 = vmor %vm313, %vm314
    %v316 = vsel %vm315, %v308, %v312
    %v317 = vand.u32 2147483647, %v307
    %vm318 = vcmp.eq.f32.partialorder %v317, 8.507059e+37
    %v319 = vand.u32 %v307, 2147483648
    %v320 = vor.u32 1.1754944e-38, %v319
    %v321 = vsel %vm318, %v320, %v316
    %v322 = vmul.f32 1.0, %v321
    %v323 = vmul.f32 %v295, 0.0
    %v324 = vmul.f32 %v295, %v299
    %326 = vrot.lane.b32.xlu0 %v324, 64
    %v327 = vpop.permute.xlu0 %326
    %v329 = vadd.f32 %v323, %v327
    %v330 = vtanh.pop %v329
    %332 = vrot.lane.b32.xlu0 %v330, 64
    %v333 = vpop.permute.xlu0 %332
    %v335 = vmul.f32 %v322, %v333
    %v336 = vld [vmem:[%s1] sm:$0x3]
    %v337 = vmul.f32 %v336, %v335
    %v338 = vsub.f32 1.0, %v336
    %v339 = vmul.f32 %v338, 0.0
    %v340 = vadd.f32 %v337, %v339
    %342 = vst [vmem:[#allocation1] ss:$4 sm:$0xff] %v329
    %v343 = vld.sshfl [vmem:[#allocation1] sm:$0xff pattern:$0x73625140]
    %344 = vrot.lane.b32.xlu0 %v343, 64
    %v345 = vpop.permute.xlu0 %344
    %v347 = vmul.f32 %v336, %v345
    %v348 = vadd.f32 %v347, %v339
    %vm349 = vcmask 254976
    %350 = vst.msk [vmem:[#allocation3] sm:$0x3] %vm349, %v337
    %s351 = scalar_lea.vmem [#allocation3], 14
    %vm352 = vcmask 517376
    %353 = vst.msk [vmem:[%s351] sm:$0x3] %vm352, %v337
    %s354 = scalar_lea.vmem [#allocation2], 4
    %v355 = vld [vmem:[%s354] sm:$0xf]
    %v356 = vpack.c.bf16 %v340, %v340
    %v357 = vld [vmem:[%s4] sm:$0xff]
    %v358 = vld [vmem:[%s4 + $0x8] sm:$0xff]
    %v359 = vld [vmem:[%s4 + $0x10] sm:$0xff]
    %v360 = vld [vmem:[%s4 + $0x18] sm:$0xff]
    %v361 = vld [vmem:[%s4 + $0x20] sm:$0xff]
    %v362 = vld [vmem:[%s4 + $0x28] sm:$0xff]
    %v363 = vld [vmem:[%s4 + $0x30] sm:$0xff]
    %v364 = vld [vmem:[%s4 + $0x38] sm:$0xff]
    %v373 = vunpack.c.l.b16 %v357
    %v374 = vunpack.c.h.b16 %v357
    %v375 = vunpack.c.l.b16 %v358
    %v376 = vunpack.c.h.b16 %v358
    %v377 = vunpack.c.l.b16 %v359
    %v378 = vunpack.c.h.b16 %v359
    %v379 = vunpack.c.l.b16 %v360
    %v380 = vunpack.c.h.b16 %v360
    %v381 = vunpack.c.l.b16 %v361
    %v382 = vunpack.c.h.b16 %v361
    %v383 = vunpack.c.l.b16 %v362
    %v384 = vunpack.c.h.b16 %v362
    %v385 = vunpack.c.l.b16 %v363
    %v386 = vunpack.c.h.b16 %v363
    %v387 = vunpack.c.l.b16 %v364
    %v388 = vunpack.c.h.b16 %v364
    %v389 = vpack.c.b16 %v375, %v373
    %v390 = vpack.c.b16 %v376, %v374
    %v391 = vpack.c.b16 %v379, %v377
    %v392 = vpack.c.b16 %v380, %v378
    %v393 = vpack.c.b16 %v383, %v381
    %v394 = vpack.c.b16 %v384, %v382
    %v395 = vpack.c.b16 %v387, %v385
    %v396 = vpack.c.b16 %v388, %v386
    %v406 = vsel %vm122, %v356, 0
    %408 = vmatpush.bf16.msra.mxu0 0
    %409 = vmatpush.bf16.msra.mxu0 0
    %410 = vmatpush.bf16.msra.mxu0 0
    %411 = vmatpush.bf16.msra.mxu0 0
    %412 = vmatpush.bf16.msra.mxu0 %v395
    %413 = vmatpush.bf16.msra.mxu0 %v393
    %414 = vmatpush.bf16.msra.mxu0 %v391
    %415 = vmatpush.bf16.msra.mxu0 %v389
    %416 = vmatmul.bf16.gmra.mxu0 %v406
    %v417 = vpop.f32.mrf.mxu0
    %v418 = vadd.f32 0.0, %v417
    %v419 = vpop.f32.mrf.mxu0
    %420 = vdwg.mxu0
    %421 = vmatpush.bf16.msra.mxu0 0
    %422 = vmatpush.bf16.msra.mxu0 0
    %423 = vmatpush.bf16.msra.mxu0 0
    %424 = vmatpush.bf16.msra.mxu0 0
    %425 = vmatpush.bf16.msra.mxu0 %v396
    %426 = vmatpush.bf16.msra.mxu0 %v394
    %427 = vmatpush.bf16.msra.mxu0 %v392
    %428 = vmatpush.bf16.msra.mxu0 %v390
    %429 = vmatmul.bf16.gmra.mxu0 %v406
    %v430 = vpop.f32.mrf.mxu0
    %v431 = vadd.f32 0.0, %v430
    %v432 = vpop.f32.mrf.mxu0
    %433 = vdwg.mxu0
    %v436 = vrot.slane %v431, 6
    %v437 = vsel %vm159, %v418, %v436
    %v439 = vadd.f32 %v355, %v437
    %v440 = vxor.u32 %v439, 2147483648
    %v441 = vmul.f32 %v440, 1.442695
    %v442 = vpow.pop %v441
    %v443 = vadd.f32 %v442, 1.0
    %v444 = vrcp.pop %v443
    %v445 = vmul.f32 %v443, %v444
    %v446 = vsub.f32 1.0, %v445
    %v447 = vmul.f32 %v444, %v446
    %v448 = vadd.f32 %v444, %v447
    %vm449 = vweird.f32 %v443
    %vm450 = vweird.f32 %v444
    %vm451 = vmor %vm449, %vm450
    %v452 = vsel %vm451, %v444, %v448
    %v453 = vand.u32 2147483647, %v443
    %vm454 = vcmp.eq.f32.partialorder %v453, 8.507059e+37
    %v455 = vand.u32 %v443, 2147483648
    %v456 = vor.u32 1.1754944e-38, %v455
    %v457 = vsel %vm454, %v456, %v452
    %v458 = vmul.f32 1.0, %v457
    %v460 = vrot.slane %v439, 2
    %v462 = vtanh.pop %v460
    %463 = vrot.lane.b32.xlu0 %v439, 64
    %v464 = vpop.permute.xlu0 %463
    %v465 = vrot.slane %v464, 2
    %v467 = vxor.u32 %v465, 2147483648
    %v468 = vmul.f32 %v467, 1.442695
    %v469 = vpow.pop %v468
    %v470 = vadd.f32 %v469, 1.0
    %v471 = vrcp.pop %v470
    %v472 = vmul.f32 %v470, %v471
    %v473 = vsub.f32 1.0, %v472
    %v474 = vmul.f32 %v471, %v473
    %v475 = vadd.f32 %v471, %v474
    %vm476 = vweird.f32 %v470
    %vm477 = vweird.f32 %v471
    %vm478 = vmor %vm476, %vm477
    %v479 = vsel %vm478, %v471, %v475
    %v480 = vand.u32 2147483647, %v470
    %vm481 = vcmp.eq.f32.partialorder %v480, 8.507059e+37
    %v482 = vand.u32 %v470, 2147483648
    %v483 = vor.u32 1.1754944e-38, %v482
    %v484 = vsel %vm481, %v483, %v479
    %v485 = vmul.f32 1.0, %v484
    %487 = vrot.lane.b32.xlu0 %v348, 64
    %v488 = vpop.permute.xlu0 %487
    %v490 = vmul.f32 %v458, %v488
    %v491 = vmul.f32 %v458, %v462
    %493 = vrot.lane.b32.xlu0 %v491, 64
    %v494 = vpop.permute.xlu0 %493
    %v496 = vadd.f32 %v490, %v494
    %v497 = vtanh.pop %v496
    %499 = vrot.lane.b32.xlu0 %v497, 64
    %v500 = vpop.permute.xlu0 %499
    %v502 = vmul.f32 %v485, %v500
    %s503 = scalar_lea.vmem %s1, 2
    %v504 = vld [vmem:[%s503] sm:$0x3]
    %v505 = vmul.f32 %v504, %v502
    %v506 = vsub.f32 1.0, %v504
    %v507 = vmul.f32 %v506, %v340
    %v508 = vadd.f32 %v505, %v507
    %510 = vst [vmem:[#allocation1] ss:$4 sm:$0xff] %v496
    %v511 = vld.sshfl [vmem:[#allocation1] sm:$0xff pattern:$0x73625140]
    %512 = vrot.lane.b32.xlu0 %v511, 64
    %v513 = vpop.permute.xlu0 %512
    %v515 = vmul.f32 %v504, %v513
    %v516 = vmul.f32 %v506, %v348
    %v517 = vadd.f32 %v515, %v516
    %s518 = scalar_lea.vmem [#allocation3], 2
    %519 = vst.msk [vmem:[%s518] sm:$0x3] %vm349, %v505
    %s520 = scalar_lea.vmem [#allocation3], 12
    %521 = vst.msk [vmem:[%s520] sm:$0x3] %vm352, %v505
    %s522 = scalar_lea.vmem [#allocation2], 8
    %v523 = vld [vmem:[%s522] sm:$0xf]
    %v524 = vpack.c.bf16 %v508, %v508
    %v525 = vld [vmem:[%s4] sm:$0xff]
    %v526 = vld [vmem:[%s4 + $0x8] sm:$0xff]
    %v527 = vld [vmem:[%s4 + $0x10] sm:$0xff]
    %v528 = vld [vmem:[%s4 + $0x18] sm:$0xff]
    %v529 = vld [vmem:[%s4 + $0x20] sm:$0xff]
    %v530 = vld [vmem:[%s4 + $0x28] sm:$0xff]
    %v531 = vld [vmem:[%s4 + $0x30] sm:$0xff]
    %v532 = vld [vmem:[%s4 + $0x38] sm:$0xff]
    %v541 = vunpack.c.l.b16 %v525
    %v542 = vunpack.c.h.b16 %v525
    %v543 = vunpack.c.l.b16 %v526
    %v544 = vunpack.c.h.b16 %v526
    %v545 = vunpack.c.l.b16 %v527
    %v546 = vunpack.c.h.b16 %v527
    %v547 = vunpack.c.l.b16 %v528
    %v548 = vunpack.c.h.b16 %v528
    %v549 = vunpack.c.l.b16 %v529
    %v550 = vunpack.c.h.b16 %v529
    %v551 = vunpack.c.l.b16 %v530
    %v552 = vunpack.c.h.b16 %v530
    %v553 = vunpack.c.l.b16 %v531
    %v554 = vunpack.c.h.b16 %v531
    %v555 = vunpack.c.l.b16 %v532
    %v556 = vunpack.c.h.b16 %v532
    %v557 = vpack.c.b16 %v543, %v541
    %v558 = vpack.c.b16 %v544, %v542
    %v559 = vpack.c.b16 %v547, %v545
    %v560 = vpack.c.b16 %v548, %v546
    %v561 = vpack.c.b16 %v551, %v549
    %v562 = vpack.c.b16 %v552, %v550
    %v563 = vpack.c.b16 %v555, %v553
    %v564 = vpack.c.b16 %v556, %v554
    %v574 = vsel %vm122, %v524, 0
    %576 = vmatpush.bf16.msra.mxu0 0
    %577 = vmatpush.bf16.msra.mxu0 0
    %578 = vmatpush.bf16.msra.mxu0 0
    %579 = vmatpush.bf16.msra.mxu0 0
    %580 = vmatpush.bf16.msra.mxu0 %v563
    %581 = vmatpush.bf16.msra.mxu0 %v561
    %582 = vmatpush.bf16.msra.mxu0 %v559
    %583 = vmatpush.bf16.msra.mxu0 %v557
    %584 = vmatmul.bf16.gmra.mxu0 %v574
    %v585 = vpop.f32.mrf.mxu0
    %v586 = vadd.f32 0.0, %v585
    %v587 = vpop.f32.mrf.mxu0
    %588 = vdwg.mxu0
    %589 = vmatpush.bf16.msra.mxu0 0
    %590 = vmatpush.bf16.msra.mxu0 0
    %591 = vmatpush.bf16.msra.mxu0 0
    %592 = vmatpush.bf16.msra.mxu0 0
    %593 = vmatpush.bf16.msra.mxu0 %v564
    %594 = vmatpush.bf16.msra.mxu0 %v562
    %595 = vmatpush.bf16.msra.mxu0 %v560
    %596 = vmatpush.bf16.msra.mxu0 %v558
    %597 = vmatmul.bf16.gmra.mxu0 %v574
    %v598 = vpop.f32.mrf.mxu0
    %v599 = vadd.f32 0.0, %v598
    %v600 = vpop.f32.mrf.mxu0
    %601 = vdwg.mxu0
    %v604 = vrot.slane %v599, 6
    %v605 = vsel %vm159, %v586, %v604
    %v607 = vadd.f32 %v523, %v605
    %v608 = vxor.u32 %v607, 2147483648
    %v609 = vmul.f32 %v608, 1.442695
    %v610 = vpow.pop %v609
    %v611 = vadd.f32 %v610, 1.0
    %v612 = vrcp.pop %v611
    %v613 = vmul.f32 %v611, %v612
    %v614 = vsub.f32 1.0, %v613
    %v615 = vmul.f32 %v612, %v614
    %v616 = vadd.f32 %v612, %v615
    %vm617 = vweird.f32 %v611
    %vm618 = vweird.f32 %v612
    %vm619 = vmor %vm617, %vm618
    %v620 = vsel %vm619, %v612, %v616
    %v621 = vand.u32 2147483647, %v611
    %vm622 = vcmp.eq.f32.partialorder %v621, 8.507059e+37
    %v623 = vand.u32 %v611, 2147483648
    %v624 = vor.u32 1.1754944e-38, %v623
    %v625 = vsel %vm622, %v624, %v620
    %v626 = vmul.f32 1.0, %v625
    %v628 = vrot.slane %v607, 2
    %v630 = vtanh.pop %v628
    %631 = vrot.lane.b32.xlu0 %v607, 64
    %v632 = vpop.permute.xlu0 %631
    %v633 = vrot.slane %v632, 2
    %v635 = vxor.u32 %v633, 2147483648
    %v636 = vmul.f32 %v635, 1.442695
    %v637 = vpow.pop %v636
    %v638 = vadd.f32 %v637, 1.0
    %v639 = vrcp.pop %v638
    %v640 = vmul.f32 %v638, %v639
    %v641 = vsub.f32 1.0, %v640
    %v642 = vmul.f32 %v639, %v641
    %v643 = vadd.f32 %v639, %v642
    %vm644 = vweird.f32 %v638
    %vm645 = vweird.f32 %v639
    %vm646 = vmor %vm644, %vm645
    %v647 = vsel %vm646, %v639, %v643
    %v648 = vand.u32 2147483647, %v638
    %vm649 = vcmp.eq.f32.partialorder %v648, 8.507059e+37
    %v650 = vand.u32 %v638, 2147483648
    %v651 = vor.u32 1.1754944e-38, %v650
    %v652 = vsel %vm649, %v651, %v647
    %v653 = vmul.f32 1.0, %v652
    %655 = vrot.lane.b32.xlu0 %v517, 64
    %v656 = vpop.permute.xlu0 %655
    %v658 = vmul.f32 %v626, %v656
    %v659 = vmul.f32 %v626, %v630
    %661 = vrot.lane.b32.xlu0 %v659, 64
    %v662 = vpop.permute.xlu0 %661
    %v664 = vadd.f32 %v658, %v662
    %v665 = vtanh.pop %v664
    %667 = vrot.lane.b32.xlu0 %v665, 64
    %v668 = vpop.permute.xlu0 %667
    %v670 = vmul.f32 %v653, %v668
    %s671 = scalar_lea.vmem %s1, 4
    %v672 = vld [vmem:[%s671] sm:$0x3]
    %v673 = vmul.f32 %v672, %v670
    %v674 = vsub.f32 1.0, %v672
    %v675 = vmul.f32 %v674, %v508
    %v676 = vadd.f32 %v673, %v675
    %678 = vst [vmem:[#allocation1] ss:$4 sm:$0xff] %v664
    %v679 = vld.sshfl [vmem:[#allocation1] sm:$0xff pattern:$0x73625140]
    %680 = vrot.lane.b32.xlu0 %v679, 64
    %v681 = vpop.permute.xlu0 %680
    %v683 = vmul.f32 %v672, %v681
    %v684 = vmul.f32 %v674, %v517
    %v685 = vadd.f32 %v683, %v684
    %s686 = scalar_lea.vmem [#allocation3], 4
    %687 = vst.msk [vmem:[%s686] sm:$0x3] %vm349, %v673
    %s688 = scalar_lea.vmem [#allocation3], 10
    %689 = vst.msk [vmem:[%s688] sm:$0x3] %vm352, %v673
    %s690 = scalar_lea.vmem [#allocation2], 12
    %v691 = vld [vmem:[%s690] sm:$0xf]
    %v692 = vpack.c.bf16 %v676, %v676
    %v693 = vld [vmem:[%s4] sm:$0xff]
    %v694 = vld [vmem:[%s4 + $0x8] sm:$0xff]
    %v695 = vld [vmem:[%s4 + $0x10] sm:$0xff]
    %v696 = vld [vmem:[%s4 + $0x18] sm:$0xff]
    %v697 = vld [vmem:[%s4 + $0x20] sm:$0xff]
    %v698 = vld [vmem:[%s4 + $0x28] sm:$0xff]
    %v699 = vld [vmem:[%s4 + $0x30] sm:$0xff]
    %v700 = vld [vmem:[%s4 + $0x38] sm:$0xff]
    %v709 = vunpack.c.l.b16 %v693
    %v710 = vunpack.c.h.b16 %v693
    %v711 = vunpack.c.l.b16 %v694
    %v712 = vunpack.c.h.b16 %v694
    %v713 = vunpack.c.l.b16 %v695
    %v714 = vunpack.c.h.b16 %v695
    %v715 = vunpack.c.l.b16 %v696
    %v716 = vunpack.c.h.b16 %v696
    %v717 = vunpack.c.l.b16 %v697
    %v718 = vunpack.c.h.b16 %v697
    %v719 = vunpack.c.l.b16 %v698
    %v720 = vunpack.c.h.b16 %v698
    %v721 = vunpack.c.l.b16 %v699
    %v722 = vunpack.c.h.b16 %v699
    %v723 = vunpack.c.l.b16 %v700
    %v724 = vunpack.c.h.b16 %v700
    %v725 = vpack.c.b16 %v711, %v709
    %v726 = vpack.c.b16 %v712, %v710
    %v727 = vpack.c.b16 %v715, %v713
    %v728 = vpack.c.b16 %v716, %v714
    %v729 = vpack.c.b16 %v719, %v717
    %v730 = vpack.c.b16 %v720, %v718
    %v731 = vpack.c.b16 %v723, %v721
    %v732 = vpack.c.b16 %v724, %v722
    %v742 = vsel %vm122, %v692, 0
    %744 = vmatpush.bf16.msra.mxu0 0
    %745 = vmatpush.bf16.msra.mxu0 0
    %746 = vmatpush.bf16.msra.mxu0 0
    %747 = vmatpush.bf16.msra.mxu0 0
    %748 = vmatpush.bf16.msra.mxu0 %v731
    %749 = vmatpush.bf16.msra.mxu0 %v729
    %750 = vmatpush.bf16.msra.mxu0 %v727
    %751 = vmatpush.bf16.msra.mxu0 %v725
    %752 = vmatmul.bf16.gmra.mxu0 %v742
    %v753 = vpop.f32.mrf.mxu0
    %v754 = vadd.f32 0.0, %v753
    %v755 = vpop.f32.mrf.mxu0
    %756 = vdwg.mxu0
    %757 = vmatpush.bf16.msra.mxu0 0
    %758 = vmatpush.bf16.msra.mxu0 0
    %759 = vmatpush.bf16.msra.mxu0 0
    %760 = vmatpush.bf16.msra.mxu0 0
    %761 = vmatpush.bf16.msra.mxu0 %v732
    %762 = vmatpush.bf16.msra.mxu0 %v730
    %763 = vmatpush.bf16.msra.mxu0 %v728
    %764 = vmatpush.bf16.msra.mxu0 %v726
    %765 = vmatmul.bf16.gmra.mxu0 %v742
    %v766 = vpop.f32.mrf.mxu0
    %v767 = vadd.f32 0.0, %v766
    %v768 = vpop.f32.mrf.mxu0
    %769 = vdwg.mxu0
    %v772 = vrot.slane %v767, 6
    %v773 = vsel %vm159, %v754, %v772
    %v775 = vadd.f32 %v691, %v773
    %v776 = vxor.u32 %v775, 2147483648
    %v777 = vmul.f32 %v776, 1.442695
    %v778 = vpow.pop %v777
    %v779 = vadd.f32 %v778, 1.0
    %v780 = vrcp.pop %v779
    %v781 = vmul.f32 %v779, %v780
    %v782 = vsub.f32 1.0, %v781
    %v783 = vmul.f32 %v780, %v782
    %v784 = vadd.f32 %v780, %v783
    %vm785 = vweird.f32 %v779
    %vm786 = vweird.f32 %v780
    %vm787 = vmor %vm785, %vm786
    %v788 = vsel %vm787, %v780, %v784
    %v789 = vand.u32 2147483647, %v779
    %vm790 = vcmp.eq.f32.partialorder %v789, 8.507059e+37
    %v791 = vand.u32 %v779, 2147483648
    %v792 = vor.u32 1.1754944e-38, %v791
    %v793 = vsel %vm790, %v792, %v788
    %v794 = vmul.f32 1.0, %v793
    %v796 = vrot.slane %v775, 2
    %v798 = vtanh.pop %v796
    %799 = vrot.lane.b32.xlu0 %v775, 64
    %v800 = vpop.permute.xlu0 %799
    %v801 = vrot.slane %v800, 2
    %v803 = vxor.u32 %v801, 2147483648
    %v804 = vmul.f32 %v803, 1.442695
    %v805 = vpow.pop %v804
    %v806 = vadd.f32 %v805, 1.0
    %v807 = vrcp.pop %v806
    %v808 = vmul.f32 %v806, %v807
    %v809 = vsub.f32 1.0, %v808
    %v810 = vmul.f32 %v807, %v809
    %v811 = vadd.f32 %v807, %v810
    %vm812 = vweird.f32 %v806
    %vm813 = vweird.f32 %v807
    %vm814 = vmor %vm812, %vm813
    %v815 = vsel %vm814, %v807, %v811
    %v816 = vand.u32 2147483647, %v806
    %vm817 = vcmp.eq.f32.partialorder %v816, 8.507059e+37
    %v818 = vand.u32 %v806, 2147483648
    %v819 = vor.u32 1.1754944e-38, %v818
    %v820 = vsel %vm817, %v819, %v815
    %v821 = vmul.f32 1.0, %v820
    %823 = vrot.lane.b32.xlu0 %v685, 64
    %v824 = vpop.permute.xlu0 %823
    %v826 = vmul.f32 %v794, %v824
    %v827 = vmul.f32 %v794, %v798
    %829 = vrot.lane.b32.xlu0 %v827, 64
    %v830 = vpop.permute.xlu0 %829
    %v832 = vadd.f32 %v826, %v830
    %v833 = vtanh.pop %v832
    %835 = vrot.lane.b32.xlu0 %v833, 64
    %v836 = vpop.permute.xlu0 %835
    %v838 = vmul.f32 %v821, %v836
    %s839 = scalar_lea.vmem %s1, 6
    %v840 = vld [vmem:[%s839] sm:$0x3]
    %v841 = vmul.f32 %v840, %v838
    %v842 = vsub.f32 1.0, %v840
    %v843 = vmul.f32 %v842, %v676
    %v844 = vadd.f32 %v841, %v843
    %846 = vst [vmem:[#allocation1] ss:$4 sm:$0xff] %v832
    %v847 = vld.sshfl [vmem:[#allocation1] sm:$0xff pattern:$0x73625140]
    %848 = vrot.lane.b32.xlu0 %v847, 64
    %v849 = vpop.permute.xlu0 %848
    %v851 = vmul.f32 %v840, %v849
    %v852 = vmul.f32 %v842, %v685
    %v853 = vadd.f32 %v851, %v852
    %s854 = scalar_lea.vmem [#allocation3], 6
    %855 = vst.msk [vmem:[%s854] sm:$0x3] %vm349, %v841
    %s856 = scalar_lea.vmem [#allocation3], 8
    %857 = vst.msk [vmem:[%s856] sm:$0x3] %vm352, %v841
    %s858 = scalar_lea.vmem [#allocation2], 16
    %v859 = vld [vmem:[%s858] sm:$0xf]
    %v860 = vpack.c.bf16 %v844, %v844
    %v861 = vld [vmem:[%s4] sm:$0xff]
    %v862 = vld [vmem:[%s4 + $0x8] sm:$0xff]
    %v863 = vld [vmem:[%s4 + $0x10] sm:$0xff]
    %v864 = vld [vmem:[%s4 + $0x18] sm:$0xff]
    %v865 = vld [vmem:[%s4 + $0x20] sm:$0xff]
    %v866 = vld [vmem:[%s4 + $0x28] sm:$0xff]
    %v867 = vld [vmem:[%s4 + $0x30] sm:$0xff]
    %v868 = vld [vmem:[%s4 + $0x38] sm:$0xff]
    %v877 = vunpack.c.l.b16 %v861
    %v878 = vunpack.c.h.b16 %v861
    %v879 = vunpack.c.l.b16 %v862
    %v880 = vunpack.c.h.b16 %v862
    %v881 = vunpack.c.l.b16 %v863
    %v882 = vunpack.c.h.b16 %v863
    %v883 = vunpack.c.l.b16 %v864
    %v884 = vunpack.c.h.b16 %v864
    %v885 = vunpack.c.l.b16 %v865
    %v886 = vunpack.c.h.b16 %v865
    %v887 = vunpack.c.l.b16 %v866
    %v888 = vunpack.c.h.b16 %v866
    %v889 = vunpack.c.l.b16 %v867
    %v890 = vunpack.c.h.b16 %v867
    %v891 = vunpack.c.l.b16 %v868
    %v892 = vunpack.c.h.b16 %v868
    %v893 = vpack.c.b16 %v879, %v877
    %v894 = vpack.c.b16 %v880, %v878
    %v895 = vpack.c.b16 %v883, %v881
    %v896 = vpack.c.b16 %v884, %v882
    %v897 = vpack.c.b16 %v887, %v885
    %v898 = vpack.c.b16 %v888, %v886
    %v899 = vpack.c.b16 %v891, %v889
    %v900 = vpack.c.b16 %v892, %v890
    %v910 = vsel %vm122, %v860, 0
    %912 = vmatpush.bf16.msra.mxu0 0
    %913 = vmatpush.bf16.msra.mxu0 0
    %914 = vmatpush.bf16.msra.mxu0 0
    %915 = vmatpush.bf16.msra.mxu0 0
    %916 = vmatpush.bf16.msra.mxu0 %v899
    %917 = vmatpush.bf16.msra.mxu0 %v897
    %918 = vmatpush.bf16.msra.mxu0 %v895
    %919 = vmatpush.bf16.msra.mxu0 %v893
    %920 = vmatmul.bf16.gmra.mxu0 %v910
    %v921 = vpop.f32.mrf.mxu0
    %v922 = vadd.f32 0.0, %v921
    %v923 = vpop.f32.mrf.mxu0
    %924 = vdwg.mxu0
    %925 = vmatpush.bf16.msra.mxu0 0
    %926 = vmatpush.bf16.msra.mxu0 0
    %927 = vmatpush.bf16.msra.mxu0 0
    %928 = vmatpush.bf16.msra.mxu0 0
    %929 = vmatpush.bf16.msra.mxu0 %v900
    %930 = vmatpush.bf16.msra.mxu0 %v898
    %931 = vmatpush.bf16.msra.mxu0 %v896
    %932 = vmatpush.bf16.msra.mxu0 %v894
    %933 = vmatmul.bf16.gmra.mxu0 %v910
    %v934 = vpop.f32.mrf.mxu0
    %v935 = vadd.f32 0.0, %v934
    %v936 = vpop.f32.mrf.mxu0
    %937 = vdwg.mxu0
    %v940 = vrot.slane %v935, 6
    %v941 = vsel %vm159, %v922, %v940
    %v943 = vadd.f32 %v859, %v941
    %v944 = vxor.u32 %v943, 2147483648
    %v945 = vmul.f32 %v944, 1.442695
    %v946 = vpow.pop %v945
    %v947 = vadd.f32 %v946, 1.0
    %v948 = vrcp.pop %v947
    %v949 = vmul.f32 %v947, %v948
    %v950 = vsub.f32 1.0, %v949
    %v951 = vmul.f32 %v948, %v950
    %v952 = vadd.f32 %v948, %v951
    %vm953 = vweird.f32 %v947
    %vm954 = vweird.f32 %v948
    %vm955 = vmor %vm953, %vm954
    %v956 = vsel %vm955, %v948, %v952
    %v957 = vand.u32 2147483647, %v947
    %vm958 = vcmp.eq.f32.partialorder %v957, 8.507059e+37
    %v959 = vand.u32 %v947, 2147483648
    %v960 = vor.u32 1.1754944e-38, %v959
    %v961 = vsel %vm958, %v960, %v956
    %v962 = vmul.f32 1.0, %v961
    %v964 = vrot.slane %v943, 2
    %v966 = vtanh.pop %v964
    %967 = vrot.lane.b32.xlu0 %v943, 64
    %v968 = vpop.permute.xlu0 %967
    %v969 = vrot.slane %v968, 2
    %v971 = vxor.u32 %v969, 2147483648
    %v972 = vmul.f32 %v971, 1.442695
    %v973 = vpow.pop %v972
    %v974 = vadd.f32 %v973, 1.0
    %v975 = vrcp.pop %v974
    %v976 = vmul.f32 %v974, %v975
    %v977 = vsub.f32 1.0, %v976
    %v978 = vmul.f32 %v975, %v977
    %v979 = vadd.f32 %v975, %v978
    %vm980 = vweird.f32 %v974
    %vm981 = vweird.f32 %v975
    %vm982 = vmor %vm980, %vm981
    %v983 = vsel %vm982, %v975, %v979
    %v984 = vand.u32 2147483647, %v974
    %vm985 = vcmp.eq.f32.partialorder %v984, 8.507059e+37
    %v986 = vand.u32 %v974, 2147483648
    %v987 = vor.u32 1.1754944e-38, %v986
    %v988 = vsel %vm985, %v987, %v983
    %v989 = vmul.f32 1.0, %v988
    %991 = vrot.lane.b32.xlu0 %v853, 64
    %v992 = vpop.permute.xlu0 %991
    %v994 = vmul.f32 %v962, %v992
    %v995 = vmul.f32 %v962, %v966
    %997 = vrot.lane.b32.xlu0 %v995, 64
    %v998 = vpop.permute.xlu0 %997
    %v1000 = vadd.f32 %v994, %v998
    %v1001 = vtanh.pop %v1000
    %1003 = vrot.lane.b32.xlu0 %v1001, 64
    %v1004 = vpop.permute.xlu0 %1003
    %v1006 = vmul.f32 %v989, %v1004
    %s1007 = scalar_lea.vmem %s1, 8
    %v1008 = vld [vmem:[%s1007] sm:$0x3]
    %v1009 = vmul.f32 %v1008, %v1006
    %v1010 = vsub.f32 1.0, %v1008
    %v1011 = vmul.f32 %v1010, %v844
    %v1012 = vadd.f32 %v1009, %v1011
    %1014 = vst [vmem:[#allocation1] ss:$4 sm:$0xff] %v1000
    %v1015 = vld.sshfl [vmem:[#allocation1] sm:$0xff pattern:$0x73625140]
    %1016 = vrot.lane.b32.xlu0 %v1015, 64
    %v1017 = vpop.permute.xlu0 %1016
    %v1019 = vmul.f32 %v1008, %v1017
    %v1020 = vmul.f32 %v1010, %v853
    %v1021 = vadd.f32 %v1019, %v1020
    %1022 = vst.msk [vmem:[%s856] sm:$0x3] %vm349, %v1009
    %1023 = vst.msk [vmem:[%s854] sm:$0x3] %vm352, %v1009
    %s1024 = scalar_lea.vmem [#allocation2], 20
    %v1025 = vld [vmem:[%s1024] sm:$0xf]
    %v1026 = vpack.c.bf16 %v1012, %v1012
    %v1027 = vld [vmem:[%s4] sm:$0xff]
    %v1028 = vld [vmem:[%s4 + $0x8] sm:$0xff]
    %v1029 = vld [vmem:[%s4 + $0x10] sm:$0xff]
    %v1030 = vld [vmem:[%s4 + $0x18] sm:$0xff]
    %v1031 = vld [vmem:[%s4 + $0x20] sm:$0xff]
    %v1032 = vld [vmem:[%s4 + $0x28] sm:$0xff]
    %v1033 = vld [vmem:[%s4 + $0x30] sm:$0xff]
    %v1034 = vld [vmem:[%s4 + $0x38] sm:$0xff]
    %v1043 = vunpack.c.l.b16 %v1027
    %v1044 = vunpack.c.h.b16 %v1027
    %v1045 = vunpack.c.l.b16 %v1028
    %v1046 = vunpack.c.h.b16 %v1028
    %v1047 = vunpack.c.l.b16 %v1029
    %v1048 = vunpack.c.h.b16 %v1029
    %v1049 = vunpack.c.l.b16 %v1030
    %v1050 = vunpack.c.h.b16 %v1030
    %v1051 = vunpack.c.l.b16 %v1031
    %v1052 = vunpack.c.h.b16 %v1031
    %v1053 = vunpack.c.l.b16 %v1032
    %v1054 = vunpack.c.h.b16 %v1032
    %v1055 = vunpack.c.l.b16 %v1033
    %v1056 = vunpack.c.h.b16 %v1033
    %v1057 = vunpack.c.l.b16 %v1034
    %v1058 = vunpack.c.h.b16 %v1034
    %v1059 = vpack.c.b16 %v1045, %v1043
    %v1060 = vpack.c.b16 %v1046, %v1044
    %v1061 = vpack.c.b16 %v1049, %v1047
    %v1062 = vpack.c.b16 %v1050, %v1048
    %v1063 = vpack.c.b16 %v1053, %v1051
    %v1064 = vpack.c.b16 %v1054, %v1052
    %v1065 = vpack.c.b16 %v1057, %v1055
    %v1066 = vpack.c.b16 %v1058, %v1056
    %v1076 = vsel %vm122, %v1026, 0
    %1078 = vmatpush.bf16.msra.mxu0 0
    %1079 = vmatpush.bf16.msra.mxu0 0
    %1080 = vmatpush.bf16.msra.mxu0 0
    %1081 = vmatpush.bf16.msra.mxu0 0
    %1082 = vmatpush.bf16.msra.mxu0 %v1065
    %1083 = vmatpush.bf16.msra.mxu0 %v1063
    %1084 = vmatpush.bf16.msra.mxu0 %v1061
    %1085 = vmatpush.bf16.msra.mxu0 %v1059
    %1086 = vmatmul.bf16.gmra.mxu0 %v1076
    %v1087 = vpop.f32.mrf.mxu0
    %v1088 = vadd.f32 0.0, %v1087
    %v1089 = vpop.f32.mrf.mxu0
    %1090 = vdwg.mxu0
    %1091 = vmatpush.bf16.msra.mxu0 0
    %1092 = vmatpush.bf16.msra.mxu0 0
    %1093 = vmatpush.bf16.msra.mxu0 0
    %1094 = vmatpush.bf16.msra.mxu0 0
    %1095 = vmatpush.bf16.msra.mxu0 %v1066
    %1096 = vmatpush.bf16.msra.mxu0 %v1064
    %1097 = vmatpush.bf16.msra.mxu0 %v1062
    %1098 = vmatpush.bf16.msra.mxu0 %v1060
    %1099 = vmatmul.bf16.gmra.mxu0 %v1076
    %v1100 = vpop.f32.mrf.mxu0
    %v1101 = vadd.f32 0.0, %v1100
    %v1102 = vpop.f32.mrf.mxu0
    %1103 = vdwg.mxu0
    %v1106 = vrot.slane %v1101, 6
    %v1107 = vsel %vm159, %v1088, %v1106
    %v1109 = vadd.f32 %v1025, %v1107
    %v1110 = vxor.u32 %v1109, 2147483648
    %v1111 = vmul.f32 %v1110, 1.442695
    %v1112 = vpow.pop %v1111
    %v1113 = vadd.f32 %v1112, 1.0
    %v1114 = vrcp.pop %v1113
    %v1115 = vmul.f32 %v1113, %v1114
    %v1116 = vsub.f32 1.0, %v1115
    %v1117 = vmul.f32 %v1114, %v1116
    %v1118 = vadd.f32 %v1114, %v1117
    %vm1119 = vweird.f32 %v1113
    %vm1120 = vweird.f32 %v1114
    %vm1121 = vmor %vm1119, %vm1120
    %v1122 = vsel %vm1121, %v1114, %v1118
    %v1123 = vand.u32 2147483647, %v1113
    %vm1124 = vcmp.eq.f32.partialorder %v1123, 8.507059e+37
    %v1125 = vand.u32 %v1113, 2147483648
    %v1126 = vor.u32 1.1754944e-38, %v1125
    %v1127 = vsel %vm1124, %v1126, %v1122
    %v1128 = vmul.f32 1.0, %v1127
    %v1130 = vrot.slane %v1109, 2
    %v1132 = vtanh.pop %v1130
    %1133 = vrot.lane.b32.xlu0 %v1109, 64
    %v1134 = vpop.permute.xlu0 %1133
    %v1135 = vrot.slane %v1134, 2
    %v1137 = vxor.u32 %v1135, 2147483648
    %v1138 = vmul.f32 %v1137, 1.442695
    %v1139 = vpow.pop %v1138
    %v1140 = vadd.f32 %v1139, 1.0
    %v1141 = vrcp.pop %v1140
    %v1142 = vmul.f32 %v1140, %v1141
    %v1143 = vsub.f32 1.0, %v1142
    %v1144 = vmul.f32 %v1141, %v1143
    %v1145 = vadd.f32 %v1141, %v1144
    %vm1146 = vweird.f32 %v1140
    %vm1147 = vweird.f32 %v1141
    %vm1148 = vmor %vm1146, %vm1147
    %v1149 = vsel %vm1148, %v1141, %v1145
    %v1150 = vand.u32 2147483647, %v1140
    %vm1151 = vcmp.eq.f32.partialorder %v1150, 8.507059e+37
    %v1152 = vand.u32 %v1140, 2147483648
    %v1153 = vor.u32 1.1754944e-38, %v1152
    %v1154 = vsel %vm1151, %v1153, %v1149
    %v1155 = vmul.f32 1.0, %v1154
    %1157 = vrot.lane.b32.xlu0 %v1021, 64
    %v1158 = vpop.permute.xlu0 %1157
    %v1160 = vmul.f32 %v1128, %v1158
    %v1161 = vmul.f32 %v1128, %v1132
    %1163 = vrot.lane.b32.xlu0 %v1161, 64
    %v1164 = vpop.permute.xlu0 %1163
    %v1166 = vadd.f32 %v1160, %v1164
    %v1167 = vtanh.pop %v1166
    %1169 = vrot.lane.b32.xlu0 %v1167, 64
    %v1170 = vpop.permute.xlu0 %1169
    %v1172 = vmul.f32 %v1155, %v1170
    %s1173 = scalar_lea.vmem %s1, 10
    %v1174 = vld [vmem:[%s1173] sm:$0x3]
    %v1175 = vmul.f32 %v1174, %v1172
    %v1176 = vsub.f32 1.0, %v1174
    %v1177 = vmul.f32 %v1176, %v1012
    %v1178 = vadd.f32 %v1175, %v1177
    %1180 = vst [vmem:[#allocation1] ss:$4 sm:$0xff] %v1166
    %v1181 = vld.sshfl [vmem:[#allocation1] sm:$0xff pattern:$0x73625140]
    %1182 = vrot.lane.b32.xlu0 %v1181, 64
    %v1183 = vpop.permute.xlu0 %1182
    %v1185 = vmul.f32 %v1174, %v1183
    %v1186 = vmul.f32 %v1176, %v1021
    %v1187 = vadd.f32 %v1185, %v1186
    %1188 = vst.msk [vmem:[%s688] sm:$0x3] %vm349, %v1175
    %1189 = vst.msk [vmem:[%s686] sm:$0x3] %vm352, %v1175
    %s1190 = scalar_lea.vmem [#allocation2], 24
    %v1191 = vld [vmem:[%s1190] sm:$0xf]
    %v1192 = vpack.c.bf16 %v1178, %v1178
    %v1193 = vld [vmem:[%s4] sm:$0xff]
    %v1194 = vld [vmem:[%s4 + $0x8] sm:$0xff]
    %v1195 = vld [vmem:[%s4 + $0x10] sm:$0xff]
    %v1196 = vld [vmem:[%s4 + $0x18] sm:$0xff]
    %v1197 = vld [vmem:[%s4 + $0x20] sm:$0xff]
    %v1198 = vld [vmem:[%s4 + $0x28] sm:$0xff]
    %v1199 = vld [vmem:[%s4 + $0x30] sm:$0xff]
    %v1200 = vld [vmem:[%s4 + $0x38] sm:$0xff]
    %v1209 = vunpack.c.l.b16 %v1193
    %v1210 = vunpack.c.h.b16 %v1193
    %v1211 = vunpack.c.l.b16 %v1194
    %v1212 = vunpack.c.h.b16 %v1194
    %v1213 = vunpack.c.l.b16 %v1195
    %v1214 = vunpack.c.h.b16 %v1195
    %v1215 = vunpack.c.l.b16 %v1196
    %v1216 = vunpack.c.h.b16 %v1196
    %v1217 = vunpack.c.l.b16 %v1197
    %v1218 = vunpack.c.h.b16 %v1197
    %v1219 = vunpack.c.l.b16 %v1198
    %v1220 = vunpack.c.h.b16 %v1198
    %v1221 = vunpack.c.l.b16 %v1199
    %v1222 = vunpack.c.h.b16 %v1199
    %v1223 = vunpack.c.l.b16 %v1200
    %v1224 = vunpack.c.h.b16 %v1200
    %v1225 = vpack.c.b16 %v1211, %v1209
    %v1226 = vpack.c.b16 %v1212, %v1210
    %v1227 = vpack.c.b16 %v1215, %v1213
    %v1228 = vpack.c.b16 %v1216, %v1214
    %v1229 = vpack.c.b16 %v1219, %v1217
    %v1230 = vpack.c.b16 %v1220, %v1218
    %v1231 = vpack.c.b16 %v1223, %v1221
    %v1232 = vpack.c.b16 %v1224, %v1222
    %v1242 = vsel %vm122, %v1192, 0
    %1244 = vmatpush.bf16.msra.mxu0 0
    %1245 = vmatpush.bf16.msra.mxu0 0
    %1246 = vmatpush.bf16.msra.mxu0 0
    %1247 = vmatpush.bf16.msra.mxu0 0
    %1248 = vmatpush.bf16.msra.mxu0 %v1231
    %1249 = vmatpush.bf16.msra.mxu0 %v1229
    %1250 = vmatpush.bf16.msra.mxu0 %v1227
    %1251 = vmatpush.bf16.msra.mxu0 %v1225
    %1252 = vmatmul.bf16.gmra.mxu0 %v1242
    %v1253 = vpop.f32.mrf.mxu0
    %v1254 = vadd.f32 0.0, %v1253
    %v1255 = vpop.f32.mrf.mxu0
    %1256 = vdwg.mxu0
    %1257 = vmatpush.bf16.msra.mxu0 0
    %1258 = vmatpush.bf16.msra.mxu0 0
    %1259 = vmatpush.bf16.msra.mxu0 0
    %1260 = vmatpush.bf16.msra.mxu0 0
    %1261 = vmatpush.bf16.msra.mxu0 %v1232
    %1262 = vmatpush.bf16.msra.mxu0 %v1230
    %1263 = vmatpush.bf16.msra.mxu0 %v1228
    %1264 = vmatpush.bf16.msra.mxu0 %v1226
    %1265 = vmatmul.bf16.gmra.mxu0 %v1242
    %v1266 = vpop.f32.mrf.mxu0
    %v1267 = vadd.f32 0.0, %v1266
    %v1268 = vpop.f32.mrf.mxu0
    %1269 = vdwg.mxu0
    %v1272 = vrot.slane %v1267, 6
    %v1273 = vsel %vm159, %v1254, %v1272
    %v1275 = vadd.f32 %v1191, %v1273
    %v1276 = vxor.u32 %v1275, 2147483648
    %v1277 = vmul.f32 %v1276, 1.442695
    %v1278 = vpow.pop %v1277
    %v1279 = vadd.f32 %v1278, 1.0
    %v1280 = vrcp.pop %v1279
    %v1281 = vmul.f32 %v1279, %v1280
    %v1282 = vsub.f32 1.0, %v1281
    %v1283 = vmul.f32 %v1280, %v1282
    %v1284 = vadd.f32 %v1280, %v1283
    %vm1285 = vweird.f32 %v1279
    %vm1286 = vweird.f32 %v1280
    %vm1287 = vmor %vm1285, %vm1286
    %v1288 = vsel %vm1287, %v1280, %v1284
    %v1289 = vand.u32 2147483647, %v1279
    %vm1290 = vcmp.eq.f32.partialorder %v1289, 8.507059e+37
    %v1291 = vand.u32 %v1279, 2147483648
    %v1292 = vor.u32 1.1754944e-38, %v1291
    %v1293 = vsel %vm1290, %v1292, %v1288
    %v1294 = vmul.f32 1.0, %v1293
    %v1296 = vrot.slane %v1275, 2
    %v1298 = vtanh.pop %v1296
    %1299 = vrot.lane.b32.xlu0 %v1275, 64
    %v1300 = vpop.permute.xlu0 %1299
    %v1301 = vrot.slane %v1300, 2
    %v1303 = vxor.u32 %v1301, 2147483648
    %v1304 = vmul.f32 %v1303, 1.442695
    %v1305 = vpow.pop %v1304
    %v1306 = vadd.f32 %v1305, 1.0
    %v1307 = vrcp.pop %v1306
    %v1308 = vmul.f32 %v1306, %v1307
    %v1309 = vsub.f32 1.0, %v1308
    %v1310 = vmul.f32 %v1307, %v1309
    %v1311 = vadd.f32 %v1307, %v1310
    %vm1312 = vweird.f32 %v1306
    %vm1313 = vweird.f32 %v1307
    %vm1314 = vmor %vm1312, %vm1313
    %v1315 = vsel %vm1314, %v1307, %v1311
    %v1316 = vand.u32 2147483647, %v1306
    %vm1317 = vcmp.eq.f32.partialorder %v1316, 8.507059e+37
    %v1318 = vand.u32 %v1306, 2147483648
    %v1319 = vor.u32 1.1754944e-38, %v1318
    %v1320 = vsel %vm1317, %v1319, %v1315
    %v1321 = vmul.f32 1.0, %v1320
    %1323 = vrot.lane.b32.xlu0 %v1187, 64
    %v1324 = vpop.permute.xlu0 %1323
    %v1326 = vmul.f32 %v1294, %v1324
    %v1327 = vmul.f32 %v1294, %v1298
    %1329 = vrot.lane.b32.xlu0 %v1327, 64
    %v1330 = vpop.permute.xlu0 %1329
    %v1332 = vadd.f32 %v1326, %v1330
    %v1333 = vtanh.pop %v1332
    %1335 = vrot.lane.b32.xlu0 %v1333, 64
    %v1336 = vpop.permute.xlu0 %1335
    %v1338 = vmul.f32 %v1321, %v1336
    %s1339 = scalar_lea.vmem %s1, 12
    %v1340 = vld [vmem:[%s1339] sm:$0x3]
    %v1341 = vmul.f32 %v1340, %v1338
    %v1342 = vsub.f32 1.0, %v1340
    %v1343 = vmul.f32 %v1342, %v1178
    %v1344 = vadd.f32 %v1341, %v1343
    %1346 = vst [vmem:[#allocation1] ss:$4 sm:$0xff] %v1332
    %v1347 = vld.sshfl [vmem:[#allocation1] sm:$0xff pattern:$0x73625140]
    %1348 = vrot.lane.b32.xlu0 %v1347, 64
    %v1349 = vpop.permute.xlu0 %1348
    %v1351 = vmul.f32 %v1340, %v1349
    %v1352 = vmul.f32 %v1342, %v1187
    %v1353 = vadd.f32 %v1351, %v1352
    %1354 = vst.msk [vmem:[%s520] sm:$0x3] %vm349, %v1341
    %1355 = vst.msk [vmem:[%s518] sm:$0x3] %vm352, %v1341
    %s1356 = scalar_lea.vmem [#allocation2], 28
    %v1357 = vld [vmem:[%s1356] sm:$0xf]
    %v1358 = vpack.c.bf16 %v1344, %v1344
    %v1359 = vld [vmem:[%s4] sm:$0xff]
    %v1360 = vld [vmem:[%s4 + $0x8] sm:$0xff]
    %v1361 = vld [vmem:[%s4 + $0x10] sm:$0xff]
    %v1362 = vld [vmem:[%s4 + $0x18] sm:$0xff]
    %v1363 = vld [vmem:[%s4 + $0x20] sm:$0xff]
    %v1364 = vld [vmem:[%s4 + $0x28] sm:$0xff]
    %v1365 = vld [vmem:[%s4 + $0x30] sm:$0xff]
    %v1366 = vld [vmem:[%s4 + $0x38] sm:$0xff]
    %v1375 = vunpack.c.l.b16 %v1359
    %v1376 = vunpack.c.h.b16 %v1359
    %v1377 = vunpack.c.l.b16 %v1360
    %v1378 = vunpack.c.h.b16 %v1360
    %v1379 = vunpack.c.l.b16 %v1361
    %v1380 = vunpack.c.h.b16 %v1361
    %v1381 = vunpack.c.l.b16 %v1362
    %v1382 = vunpack.c.h.b16 %v1362
    %v1383 = vunpack.c.l.b16 %v1363
    %v1384 = vunpack.c.h.b16 %v1363
    %v1385 = vunpack.c.l.b16 %v1364
    %v1386 = vunpack.c.h.b16 %v1364
    %v1387 = vunpack.c.l.b16 %v1365
    %v1388 = vunpack.c.h.b16 %v1365
    %v1389 = vunpack.c.l.b16 %v1366
    %v1390 = vunpack.c.h.b16 %v1366
    %v1391 = vpack.c.b16 %v1377, %v1375
    %v1392 = vpack.c.b16 %v1378, %v1376
    %v1393 = vpack.c.b16 %v1381, %v1379
    %v1394 = vpack.c.b16 %v1382, %v1380
    %v1395 = vpack.c.b16 %v1385, %v1383
    %v1396 = vpack.c.b16 %v1386, %v1384
    %v1397 = vpack.c.b16 %v1389, %v1387
    %v1398 = vpack.c.b16 %v1390, %v1388
    %v1408 = vsel %vm122, %v1358, 0
    %1410 = vmatpush.bf16.msra.mxu0 0
    %1411 = vmatpush.bf16.msra.mxu0 0
    %1412 = vmatpush.bf16.msra.mxu0 0
    %1413 = vmatpush.bf16.msra.mxu0 0
    %1414 = vmatpush.bf16.msra.mxu0 %v1397
    %1415 = vmatpush.bf16.msra.mxu0 %v1395
    %1416 = vmatpush.bf16.msra.mxu0 %v1393
    %1417 = vmatpush.bf16.msra.mxu0 %v1391
    %1418 = vmatmul.bf16.gmra.mxu0 %v1408
    %v1419 = vpop.f32.mrf.mxu0
    %v1420 = vadd.f32 0.0, %v1419
    %v1421 = vpop.f32.mrf.mxu0
    %1422 = vdwg.mxu0
    %1423 = vmatpush.bf16.msra.mxu0 0
    %1424 = vmatpush.bf16.msra.mxu0 0
    %1425 = vmatpush.bf16.msra.mxu0 0
    %1426 = vmatpush.bf16.msra.mxu0 0
    %1427 = vmatpush.bf16.msra.mxu0 %v1398
    %1428 = vmatpush.bf16.msra.mxu0 %v1396
    %1429 = vmatpush.bf16.msra.mxu0 %v1394
    %1430 = vmatpush.bf16.msra.mxu0 %v1392
    %1431 = vmatmul.bf16.gmra.mxu0 %v1408
    %v1432 = vpop.f32.mrf.mxu0
    %v1433 = vadd.f32 0.0, %v1432
    %v1434 = vpop.f32.mrf.mxu0
    %1435 = vdwg.mxu0
    %v1438 = vrot.slane %v1433, 6
    %v1439 = vsel %vm159, %v1420, %v1438
    %v1441 = vadd.f32 %v1357, %v1439
    %v1442 = vxor.u32 %v1441, 2147483648
    %v1443 = vmul.f32 %v1442, 1.442695
    %v1444 = vpow.pop %v1443
    %v1445 = vadd.f32 %v1444, 1.0
    %v1446 = vrcp.pop %v1445
    %v1447 = vmul.f32 %v1445, %v1446
    %v1448 = vsub.f32 1.0, %v1447
    %v1449 = vmul.f32 %v1446, %v1448
    %v1450 = vadd.f32 %v1446, %v1449
    %vm1451 = vweird.f32 %v1445
    %vm1452 = vweird.f32 %v1446
    %vm1453 = vmor %vm1451, %vm1452
    %v1454 = vsel %vm1453, %v1446, %v1450
    %v1455 = vand.u32 2147483647, %v1445
    %vm1456 = vcmp.eq.f32.partialorder %v1455, 8.507059e+37
    %v1457 = vand.u32 %v1445, 2147483648
    %v1458 = vor.u32 1.1754944e-38, %v1457
    %v1459 = vsel %vm1456, %v1458, %v1454
    %v1460 = vmul.f32 1.0, %v1459
    %v1462 = vrot.slane %v1441, 2
    %v1464 = vtanh.pop %v1462
    %1465 = vrot.lane.b32.xlu0 %v1441, 64
    %v1466 = vpop.permute.xlu0 %1465
    %v1467 = vrot.slane %v1466, 2
    %v1469 = vxor.u32 %v1467, 2147483648
    %v1470 = vmul.f32 %v1469, 1.442695
    %v1471 = vpow.pop %v1470
    %v1472 = vadd.f32 %v1471, 1.0
    %v1473 = vrcp.pop %v1472
    %v1474 = vmul.f32 %v1472, %v1473
    %v1475 = vsub.f32 1.0, %v1474
    %v1476 = vmul.f32 %v1473, %v1475
    %v1477 = vadd.f32 %v1473, %v1476
    %vm1478 = vweird.f32 %v1472
    %vm1479 = vweird.f32 %v1473
    %vm1480 = vmor %vm1478, %vm1479
    %v1481 = vsel %vm1480, %v1473, %v1477
    %v1482 = vand.u32 2147483647, %v1472
    %vm1483 = vcmp.eq.f32.partialorder %v1482, 8.507059e+37
    %v1484 = vand.u32 %v1472, 2147483648
    %v1485 = vor.u32 1.1754944e-38, %v1484
    %v1486 = vsel %vm1483, %v1485, %v1481
    %v1487 = vmul.f32 1.0, %v1486
    %1489 = vrot.lane.b32.xlu0 %v1353, 64
    %v1490 = vpop.permute.xlu0 %1489
    %v1492 = vmul.f32 %v1460, %v1490
    %v1493 = vmul.f32 %v1460, %v1464
    %1495 = vrot.lane.b32.xlu0 %v1493, 64
    %v1496 = vpop.permute.xlu0 %1495
    %v1498 = vadd.f32 %v1492, %v1496
    %v1499 = vtanh.pop %v1498
    %1501 = vrot.lane.b32.xlu0 %v1499, 64
    %v1502 = vpop.permute.xlu0 %1501
    %v1504 = vmul.f32 %v1487, %v1502
    %s1505 = scalar_lea.vmem %s1, 14
    %v1506 = vld [vmem:[%s1505] sm:$0x3]
    %v1507 = vmul.f32 %v1506, %v1504
    %v1508 = vsub.f32 1.0, %v1506
    %v1509 = vmul.f32 %v1508, %v1344
    %v1510 = vadd.f32 %v1507, %v1509
    %1511 = vst.msk [vmem:[%s351] sm:$0x3] %vm349, %v1507
    %1512 = vst.msk [vmem:[#allocation3] sm:$0x3] %vm352, %v1507
    %v1513 = vld [vmem:[#allocation3] sm:$0x3]
    %v1514 = vld [vmem:[#allocation3 + $0x2] sm:$0x3]
    %v1515 = vld [vmem:[#allocation3 + $0x4] sm:$0x3]
    %v1516 = vld [vmem:[#allocation3 + $0x6] sm:$0x3]
    %v1517 = vld [vmem:[#allocation3 + $0x8] sm:$0x3]
    %v1518 = vld [vmem:[#allocation3 + $0xa] sm:$0x3]
    %v1519 = vld [vmem:[#allocation3 + $0xc] sm:$0x3]
    %v1520 = vld [vmem:[#allocation3 + $0xe] sm:$0x3]
    %1529 = vst [vmem:[#allocation1] ss:$4 sm:$0xff] %v1513
    %s1530 = scalar_lea.vmem [#allocation1], 1
    %1531 = vst [vmem:[%s1530] ss:$4 sm:$0xff] %v1514
    %s1532 = scalar_lea.vmem [#allocation1], 2
    %1533 = vst [vmem:[%s1532] ss:$4 sm:$0xff] %v1515
    %s1534 = scalar_lea.vmem [#allocation1], 3
    %1535 = vst [vmem:[%s1534] ss:$4 sm:$0xff] %v1516
    %s1536 = scalar_lea.vmem [#allocation1], 32
    %1537 = vst [vmem:[%s1536] ss:$4 sm:$0xff] %v1517
    %s1538 = scalar_lea.vmem [#allocation1], 33
    %1539 = vst [vmem:[%s1538] ss:$4 sm:$0xff] %v1518
    %s1540 = scalar_lea.vmem [#allocation1], 34
    %1541 = vst [vmem:[%s1540] ss:$4 sm:$0xff] %v1519
    %s1542 = scalar_lea.vmem [#allocation1], 35
    %1543 = vst [vmem:[%s1542] ss:$4 sm:$0xff] %v1520
    %v1544 = vld.sshfl [vmem:[#allocation1] sm:$0xff pattern:$0x73625140]
    %v1545 = vld.sshfl [vmem:[#allocation1 + $0x20] sm:$0xff pattern:$0x73625140]
    %v1548 = vpack.c.bf16 %v1545, %v1544
    %v1549 = vld [vmem:[%s5] sm:$0xf]
    %v1550 = vld [vmem:[%s5 + $0x4] sm:$0xf]
    %v1551 = vld [vmem:[%s5 + $0x8] sm:$0xf]
    %v1552 = vld [vmem:[%s5 + $0xc] sm:$0xf]
    %v1553 = vld [vmem:[%s5 + $0x10] sm:$0xf]
    %v1554 = vld [vmem:[%s5 + $0x14] sm:$0xf]
    %v1555 = vld [vmem:[%s5 + $0x18] sm:$0xf]
    %v1556 = vld [vmem:[%s5 + $0x1c] sm:$0xf]
    %v1557 = vld [vmem:[%s6] sm:$0x1]
    %v1559 = vperm.slane %v1557, 0
    %v1569 = vunpack.c.l.b16 %v1549
    %v1570 = vunpack.c.l.b16 %v1550
    %v1571 = vunpack.c.l.b16 %v1551
    %v1572 = vunpack.c.l.b16 %v1552
    %v1573 = vunpack.c.l.b16 %v1553
    %v1574 = vunpack.c.l.b16 %v1554
    %v1575 = vunpack.c.l.b16 %v1555
    %v1576 = vunpack.c.l.b16 %v1556
    %v1577 = vpack.c.b16 %v1570, %v1569
    %v1578 = vpack.c.b16 %v1572, %v1571
    %v1579 = vpack.c.b16 %v1574, %v1573
    %v1580 = vpack.c.b16 %v1576, %v1575
    %v1586 = vsel %vm122, %v1548, 0
    %1588 = vmatpush.bf16.msra.mxu0 0
    %1589 = vmatpush.bf16.msra.mxu0 0
    %1590 = vmatpush.bf16.msra.mxu0 0
    %1591 = vmatpush.bf16.msra.mxu0 0
    %1592 = vmatpush.bf16.msra.mxu0 %v1580
    %1593 = vmatpush.bf16.msra.mxu0 %v1579
    %1594 = vmatpush.bf16.msra.mxu0 %v1578
    %1595 = vmatpush.bf16.msra.mxu0 %v1577
    %1596 = vmatmul.bf16.gmra.mxu0 %v1586
    %v1597 = vpop.f32.mrf.mxu0
    %v1598 = vadd.f32 %v1559, %v1597
    %v1599 = vpop.f32.mrf.mxu0
    %v1600 = vadd.f32 %v1559, %v1599
    %1601 = vdwg.mxu0
    %v1604 = vrot.slane %v1598, 2
    %v1605 = vrot.slane %v1598, 4
    %v1606 = vrot.slane %v1598, 6
    %v1607 = vrot.slane %v1600, 2
    %v1608 = vrot.slane %v1600, 4
    %v1609 = vrot.slane %v1600, 6
    %1616 = vst [vmem:[%s9] sm:$0x3] %v1598
    %1617 = vst [vmem:[%s9 + $0x2] sm:$0x3] %v1604
    %1618 = vst [vmem:[%s9 + $0x4] sm:$0x3] %v1605
    %1619 = vst [vmem:[%s9 + $0x6] sm:$0x3] %v1606
    %1620 = vst [vmem:[%s9 + $0x8] sm:$0x3] %v1600
    %1621 = vst [vmem:[%s9 + $0xa] sm:$0x3] %v1607
    %1622 = vst [vmem:[%s9 + $0xc] sm:$0x3] %v1608
    %1623 = vst [vmem:[%s9 + $0xe] sm:$0x3] %v1609
    %v1624 = vpack.c.bf16 %v1510, %v1510
    %v1625 = vld [vmem:[%s7] sm:$0xf]
    %v1626 = vld [vmem:[%s7 + $0x4] sm:$0xf]
    %v1627 = vld [vmem:[%s7 + $0x8] sm:$0xf]
    %v1628 = vld [vmem:[%s7 + $0xc] sm:$0xf]
    %v1629 = vld [vmem:[%s7 + $0x10] sm:$0xf]
    %v1630 = vld [vmem:[%s7 + $0x14] sm:$0xf]
    %v1631 = vld [vmem:[%s7 + $0x18] sm:$0xf]
    %v1632 = vld [vmem:[%s7 + $0x1c] sm:$0xf]
    %v1633 = vld [vmem:[%s8] sm:$0x1]
    %v1635 = vperm.slane %v1633, 0
    %v1645 = vunpack.c.l.b16 %v1625
    %v1646 = vunpack.c.l.b16 %v1626
    %v1647 = vunpack.c.l.b16 %v1627
    %v1648 = vunpack.c.l.b16 %v1628
    %v1649 = vunpack.c.l.b16 %v1629
    %v1650 = vunpack.c.l.b16 %v1630
    %v1651 = vunpack.c.l.b16 %v1631
    %v1652 = vunpack.c.l.b16 %v1632
    %v1653 = vpack.c.b16 %v1646, %v1645
    %v1654 = vpack.c.b16 %v1648, %v1647
    %v1655 = vpack.c.b16 %v1650, %v1649
    %v1656 = vpack.c.b16 %v1652, %v1651
    %v1662 = vsel %vm122, %v1624, 0
    %1664 = vmatpush.bf16.msra.mxu0 0
    %1665 = vmatpush.bf16.msra.mxu0 0
    %1666 = vmatpush.bf16.msra.mxu0 0
    %1667 = vmatpush.bf16.msra.mxu0 0
    %1668 = vmatpush.bf16.msra.mxu0 %v1656
    %1669 = vmatpush.bf16.msra.mxu0 %v1655
    %1670 = vmatpush.bf16.msra.mxu0 %v1654
    %1671 = vmatpush.bf16.msra.mxu0 %v1653
    %1672 = vmatmul.bf16.gmra.mxu0 %v1662
    %v1673 = vpop.f32.mrf.mxu0
    %v1674 = vadd.f32 %v1635, %v1673
    %v1675 = vpop.f32.mrf.mxu0
    %1676 = vdwg.mxu0
    %1677 = vst [vmem:[#allocation4] sm:$0x3] %v1674
    // Predicated region
    $region38: #{_lambda_.1} parent=1 // pred_check
      _
    $region39: #{_lambda_.1} parent=1 // pred_check_branch
      %1679 = sbr.rel (0) target = $region41
    $region40: #{_lambda_.1} parent=1 // pred_region
      _
    $region41: #{_lambda_.1} parent=1 // pred_fallthru
      _
    // Predicated region
    $region42: #{_lambda_.1} parent=1 // pred_check
      _
    $region43: #{_lambda_.1} parent=1 // pred_check_branch
      %1681 = sbr.rel (0) target = $region45
    $region44: #{_lambda_.1} parent=1 // pred_region
      %1683 = vsyncadd [#allocation5], 0
      %s1685 = sshll.u32 [#allocation4], 4
      %s1686 = int_to_ptr.vmem [resolvable:$true] %s1685
      %s1687 = sshll.u32 %s10, 4
      %s1688 = int_to_ptr.hbm [resolvable:$true] %s1687
      %1690 = dma.vmem_to_hbm [thread:$0]  %s1686, 32, %s1688, [#allocation5]
    $region45: #{_lambda_.1} parent=1 // pred_fallthru
      _
    // Predicated region
    $region46: #{_lambda_.1} parent=1 // pred_check
      _
    $region47: #{_lambda_.1} parent=1 // pred_check_branch
      %1692 = sbr.rel (0) target = $region49
    $region48: #{_lambda_.1} parent=1 // pred_region
      _
    $region49: #{_lambda_.1} parent=1 // pred_fallthru
      _
    // Predicated region
    $region50: #{_lambda_.1} parent=1 // pred_check
      _
    $region51: #{_lambda_.1} parent=1 // pred_check_branch
      %1694 = sbr.rel (0) target = $region53
    $region52: #{_lambda_.1} parent=1 // pred_region
      %1696 = dma.done [#allocation5], 32
    $region53: #{_lambda_.1} parent=1 // pred_fallthru
      _
    %1697 = vsyncpa [#allocation5], 1

</llo_original>
